<compile_context>
chip_gen: v7x
topology: tpu7x:2x2x1
jax: 0.10.0
libtpu: 0.0.40
codegen_flags: <defaults>
</compile_context>

<pallas_src>
import math
from functools import partial

import jax
import jax.numpy as jnp
from jax.experimental import pallas as pl
from jax.experimental.pallas import tpu as pltpu

LANES = 128  # TPU lane width


def autoencoder_kernel(x_ref, wadj_ref, wsq_ref, vb_ref, sq_ref, *, hidden_dim, d, bt):
    """One lane-dense chunk (bt whole samples = bt*d columns) of the forward pass.

    Layouts (all f32):
      x_ref   : (1, NC)        NC = bt*d chunk of the flattened input; column
                               c = local_sample*d + node.
      wadj_ref: (d, d)         (1 - I) * w, resident across the grid.
      wsq_ref : (6H, H)        six transposed square weights stacked on sublanes:
                               ew1, ew2, ew3, dw0, dw1, dw2 (row offsets k*H).
      vb_ref  : (9H + 8, NC)   nine H-vectors pre-broadcast across all NC lanes
                               (ew0, eb0..eb3, db0..db2, dw3); db3 in row 9H.
      sq_ref  : (1, NC)        per-column squared reconstruction error.
    """
    H = hidden_dim
    x_row = x_ref[...]                                    # (1, NC)

    def wt(k):                                            # (H, H) transposed weight (free row slice)
        return wsq_ref[k * H:(k + 1) * H, :]

    def vec(k):                                           # (H, NC) pre-broadcast vector (free row slice)
        return vb_ref[k * H:(k + 1) * H, :]

    ew0_b = vec(0)
    eb0_b, eb1_b, eb2_b, eb3_b = vec(1), vec(2), vec(3), vec(4)
    db0_b, db1_b, db2_b = vec(5), vec(6), vec(7)
    dw3_b = vec(8)
    db3_b = vb_ref[9 * H:9 * H + 1, :]                    # (1, NC)

    # ----- encoder MLP (input_dim == 1): 1 -> H (ReLU) -> H (ReLU) -> H (ReLU) -> H -----
    h = jnp.maximum(ew0_b * x_row + eb0_b, 0.0)           # broadcast multiply, no K=1 dot
    h = jnp.maximum(jnp.dot(wt(0), h, preferred_element_type=jnp.float32) + eb1_b, 0.0)
    h = jnp.maximum(jnp.dot(wt(1), h, preferred_element_type=jnp.float32) + eb2_b, 0.0)
    h = jnp.dot(wt(2), h, preferred_element_type=jnp.float32) + eb3_b     # (H, NC)

    # ----- graph mixing einsum('ijk,jl->ilk'): per-sample (H, d) @ (d, d) dots -----
    # (only the small w_adj is used; no kron / block-diagonal matrix)
    wadj = wadj_ref[...]
    blocks = [
        jnp.dot(h[:, p * d:(p + 1) * d], wadj, preferred_element_type=jnp.float32)
        for p in range(bt)
    ]
    g = jnp.concatenate(blocks, axis=1)                   # (H, NC)

    # ----- decoder MLP: H -> H (ReLU) x3 -> 1 -----
    g = jnp.maximum(jnp.dot(wt(3), g, preferred_element_type=jnp.float32) + db0_b, 0.0)
    g = jnp.maximum(jnp.dot(wt(4), g, preferred_element_type=jnp.float32) + db1_b, 0.0)
    g = jnp.maximum(jnp.dot(wt(5), g, preferred_element_type=jnp.float32) + db2_b, 0.0)
    x_est = jnp.sum(dw3_b * g, axis=0, keepdims=True) + db3_b             # (1, NC)

    # ----- per-column squared error (lane-dense store; reduced to the loss outside) -----
    diff = x_row - x_est
    sq_ref[...] = diff * diff


def _pack_square_weights(p, H):
    """(6H, H) slab: six transposed (H, H) weights stacked sublane-major."""
    return jnp.concatenate(
        [p[name].T.astype(jnp.float32)
         for name in ("ew1", "ew2", "ew3", "dw0", "dw1", "dw2")],
        axis=0)


def _pack_vectors(p, H, NC):
    """(9H + 8, NC) slab: nine H-vectors pre-broadcast across NC lanes + db3 row."""
    vecs = jnp.stack(
        [p[name].reshape(H).astype(jnp.float32)
         for name in ("ew0", "eb0", "eb1", "eb2", "eb3", "db0", "db1", "db2", "dw3")],
        axis=0)                                                     # (9, H)
    vb = jnp.broadcast_to(vecs.reshape(9 * H, 1), (9 * H, NC))
    db3_row = jnp.broadcast_to(p["db3"].reshape(1, 1).astype(jnp.float32), (1, NC))
    pad = jnp.zeros((7, NC), jnp.float32)
    return jnp.concatenate([vb, db3_row, pad], axis=0)


def _autoencoder_forward(x, params):
    B, d = x.shape
    H = params["ew1"].shape[0]
    assert params["ew0"].shape[0] == 1, "kernel specializes input_dim == 1 (as AutoEncoder.forward does)"
    assert H % 8 == 0, "hidden_dim must be a multiple of 8 for free sublane slices of the weight slab"

    # Lane-dense chunk: smallest multiple of d that is also a multiple of 128 lanes.
    NC = d * (LANES // math.gcd(d, LANES))
    bt = NC // d                              # whole samples per chunk
    n_chunks = -(-B // bt)                    # cdiv
    B_pad = n_chunks * bt
    N_pad = B_pad * d

    # w_adj = (1 - eye(d)) * w : elementwise, fused by XLA in the wrapper.
    w_adj = (1.0 - jnp.eye(d, dtype=jnp.float32)) * params["w"].astype(jnp.float32)

    # Flatten + zero-pad the batch axis to a whole number of chunks (padded
    # columns are sliced away before the loss reduction below).
    x_t = x.astype(jnp.float32).reshape(1, B * d)
    x_t = jnp.pad(x_t, ((0, 0), (0, N_pad - B * d)))

    wsq = _pack_square_weights(params, H)     # (6H, H)
    vb = _pack_vectors(params, H, NC)         # (9H + 8, NC)

    kernel = partial(autoencoder_kernel, hidden_dim=H, d=d, bt=bt)
    sq = pl.pallas_call(
        kernel,
        out_shape=jax.ShapeDtypeStruct((1, N_pad), jnp.float32),
        grid=(n_chunks,),
        in_specs=[
            pl.BlockSpec((1, NC), lambda i: (0, i)),       # x chunk (streamed per step)
            pl.BlockSpec((d, d), lambda i: (0, 0)),        # w_adj (resident)
            pl.BlockSpec(wsq.shape, lambda i: (0, 0)),     # square-weight slab (resident)
            pl.BlockSpec(vb.shape, lambda i: (0, 0)),      # pre-broadcast vector slab (resident)
        ],
        out_specs=pl.BlockSpec((1, NC), lambda i: (0, i)),
        compiler_params=pltpu.CompilerParams(
            dimension_semantics=("parallel",)),            # chunks independent -> 2 TCs on v7x
    )(x_t, w_adj, wsq, vb)

    # mse_loss = || x - x_est ||_2^2 over the valid (un-padded) columns.
    loss = jnp.sum(sq[0, :B * d])
    return loss, w_adj


autoencoder_forward = jax.jit(_autoencoder_forward)


def init_params(key, d, input_dim=1, hidden_dim=16):
    """Deterministic parameter init (PyTorch-style uniform(-1/sqrt(fan_in), ...))."""
    keys = jax.random.split(key, 20)

    def linear(kw, kb, fan_in, fan_out):
        bound = 1.0 / jnp.sqrt(jnp.float32(fan_in))
        W = jax.random.uniform(kw, (fan_in, fan_out), jnp.float32, -bound, bound)
        b = jax.random.uniform(kb, (1, fan_out), jnp.float32, -bound, bound)
        return W, b

    p = {}
    # encoder: input_dim -> H -> H -> H -> H
    p["ew0"], p["eb0"] = linear(keys[0], keys[1], input_dim, hidden_dim)
    p["ew1"], p["eb1"] = linear(keys[2], keys[3], hidden_dim, hidden_dim)
    p["ew2"], p["eb2"] = linear(keys[4], keys[5], hidden_dim, hidden_dim)
    p["ew3"], p["eb3"] = linear(keys[6], keys[7], hidden_dim, hidden_dim)
    # decoder: H -> H -> H -> H -> input_dim
    p["dw0"], p["db0"] = linear(keys[8], keys[9], hidden_dim, hidden_dim)
    p["dw1"], p["db1"] = linear(keys[10], keys[11], hidden_dim, hidden_dim)
    p["dw2"], p["db2"] = linear(keys[12], keys[13], hidden_dim, hidden_dim)
    p["dw3"], p["db3"] = linear(keys[14], keys[15], hidden_dim, input_dim)
    # graph weight w: uniform(-0.1, 0.1), shape (d, d)
    p["w"] = jax.random.uniform(keys[16], (d, d), jnp.float32, -0.1, 0.1)
    return p


def reference_forward(x, p):
    """Pure-JAX reference mirroring the PyTorch module exactly."""
    B, d = x.shape
    w_adj = (1.0 - jnp.eye(d, dtype=jnp.float32)) * p["w"]
    h = x.reshape(-1, 1)
    h = jnp.maximum(h @ p["ew0"] + p["eb0"], 0.0)
    h = jnp.maximum(h @ p["ew1"] + p["eb1"], 0.0)
    h = jnp.maximum(h @ p["ew2"] + p["eb2"], 0.0)
    h = h @ p["ew3"] + p["eb3"]
    out = h.reshape(B, -1, h.shape[-1])                    # (B, d, H)
    out = jnp.einsum('ijk,jl->ilk', out, w_adj)            # (B, d, H)
    g = out.reshape(-1, out.shape[-1])
    g = jnp.maximum(g @ p["dw0"] + p["db0"], 0.0)
    g = jnp.maximum(g @ p["dw1"] + p["db1"], 0.0)
    g = jnp.maximum(g @ p["dw2"] + p["db2"], 0.0)
    x_est = (g @ p["dw3"] + p["db3"]).reshape(B, d, 1)
    diff = x.reshape(B, d, 1) - x_est
    loss = jnp.sum(diff * diff)
    return loss, w_adj


if __name__ == "__main__":
    B, d, hidden_dim = 2, 16, 16
    key = jax.random.PRNGKey(0)
    kx, kp = jax.random.split(key)

    x = jax.random.normal(kx, (B, d), dtype=jnp.float32)
    params = init_params(kp, d=d, input_dim=1, hidden_dim=hidden_dim)

    loss, w_adj = autoencoder_forward(x, params)
    loss = jax.block_until_ready(loss)
    w_adj = jax.block_until_ready(w_adj)

    ref_loss, ref_w_adj = reference_forward(x, params)

    assert jnp.allclose(loss, ref_loss, rtol=1e-4, atol=1e-4), (loss, ref_loss)
    assert jnp.allclose(w_adj, ref_w_adj, rtol=1e-5, atol=1e-5)

    print("KERNEL_OK")
</pallas_src>

<mosaic_0001>
module attributes {stable_mosaic.version = 11 : i64} {
  func.func @autoencoder_kernel(%arg0: i32, %arg1: memref<1x128xf32, #tpu.memory_space<vmem>>, %arg2: memref<16x16xf32, #tpu.memory_space<vmem>>, %arg3: memref<96x16xf32, #tpu.memory_space<vmem>>, %arg4: memref<152x128xf32, #tpu.memory_space<vmem>>, %arg5: memref<1x128xf32, #tpu.memory_space<vmem>>) attributes {dimension_semantics = [#tpu.dimension_semantics<parallel>], iteration_bounds = array<i64: 1>, scalar_prefetch = 0 : i64, scratch_operands = 0 : i64, tpu.core_type = #tpu.core_type<tc>, window_params = [{transform_indices = @transform_0, window_bounds = array<i64: 1, 128>}, {pipeline_mode = #tpu.pipeline_mode<synchronous>, transform_indices = @transform_1, window_bounds = array<i64: 16, 16>}, {pipeline_mode = #tpu.pipeline_mode<synchronous>, transform_indices = @transform_2, window_bounds = array<i64: 96, 16>}, {pipeline_mode = #tpu.pipeline_mode<synchronous>, transform_indices = @transform_3, window_bounds = array<i64: 152, 128>}, {transform_indices = @transform_4, window_bounds = array<i64: 1, 128>}]} {
    %c0 = arith.constant 0 : index
    %c0_0 = arith.constant 0 : index
    %0 = vector.load %arg1[%c0, %c0_0] : memref<1x128xf32, #tpu.memory_space<vmem>>, vector<1x128xf32>
    %c0_1 = arith.constant 0 : index
    %c0_2 = arith.constant 0 : index
    %1 = vector.load %arg4[%c0_1, %c0_2] : memref<152x128xf32, #tpu.memory_space<vmem>>, vector<16x128xf32>
    %c16 = arith.constant 16 : index
    %c0_3 = arith.constant 0 : index
    %2 = vector.load %arg4[%c16, %c0_3] : memref<152x128xf32, #tpu.memory_space<vmem>>, vector<16x128xf32>
    %c32 = arith.constant 32 : index
    %c0_4 = arith.constant 0 : index
    %3 = vector.load %arg4[%c32, %c0_4] : memref<152x128xf32, #tpu.memory_space<vmem>>, vector<16x128xf32>
    %c48 = arith.constant 48 : index
    %c0_5 = arith.constant 0 : index
    %4 = vector.load %arg4[%c48, %c0_5] : memref<152x128xf32, #tpu.memory_space<vmem>>, vector<16x128xf32>
    %c64 = arith.constant 64 : index
    %c0_6 = arith.constant 0 : index
    %5 = vector.load %arg4[%c64, %c0_6] : memref<152x128xf32, #tpu.memory_space<vmem>>, vector<16x128xf32>
    %c80 = arith.constant 80 : index
    %c0_7 = arith.constant 0 : index
    %6 = vector.load %arg4[%c80, %c0_7] : memref<152x128xf32, #tpu.memory_space<vmem>>, vector<16x128xf32>
    %c96 = arith.constant 96 : index
    %c0_8 = arith.constant 0 : index
    %7 = vector.load %arg4[%c96, %c0_8] : memref<152x128xf32, #tpu.memory_space<vmem>>, vector<16x128xf32>
    %c112 = arith.constant 112 : index
    %c0_9 = arith.constant 0 : index
    %8 = vector.load %arg4[%c112, %c0_9] : memref<152x128xf32, #tpu.memory_space<vmem>>, vector<16x128xf32>
    %c128 = arith.constant 128 : index
    %c0_10 = arith.constant 0 : index
    %9 = vector.load %arg4[%c128, %c0_10] : memref<152x128xf32, #tpu.memory_space<vmem>>, vector<16x128xf32>
    %c144 = arith.constant 144 : index
    %c0_11 = arith.constant 0 : index
    %10 = vector.load %arg4[%c144, %c0_11] : memref<152x128xf32, #tpu.memory_space<vmem>>, vector<1x128xf32>
    %11 = vector.broadcast %0 : vector<1x128xf32> to vector<16x128xf32>
    %12 = arith.mulf %1, %11 : vector<16x128xf32>
    %13 = arith.addf %12, %2 : vector<16x128xf32>
    %cst = arith.constant 0.000000e+00 : f32
    %14 = vector.broadcast %cst : f32 to vector<16x128xf32>
    %15 = arith.maximumf %13, %14 : vector<16x128xf32>
    %c0_12 = arith.constant 0 : index
    %c0_13 = arith.constant 0 : index
    %16 = vector.load %arg3[%c0_12, %c0_13] : memref<96x16xf32, #tpu.memory_space<vmem>>, vector<16x16xf32>
    %cst_14 = arith.constant dense<0.000000e+00> : vector<16x128xf32>
    %17 = tpu.matmul %16, %15, %cst_14 {dimension_numbers = #tpu.dot_dimension_numbers<[1], [0], [0], [1], [0, 0, 1, 1], [], []>} : vector<16x16xf32>, vector<16x128xf32>, vector<16x128xf32> -> vector<16x128xf32>
    %18 = arith.addf %17, %3 : vector<16x128xf32>
    %cst_15 = arith.constant 0.000000e+00 : f32
    %19 = vector.broadcast %cst_15 : f32 to vector<16x128xf32>
    %20 = arith.maximumf %18, %19 : vector<16x128xf32>
    %c16_16 = arith.constant 16 : index
    %c0_17 = arith.constant 0 : index
    %21 = vector.load %arg3[%c16_16, %c0_17] : memref<96x16xf32, #tpu.memory_space<vmem>>, vector<16x16xf32>
    %cst_18 = arith.constant dense<0.000000e+00> : vector<16x128xf32>
    %22 = tpu.matmul %21, %20, %cst_18 {dimension_numbers = #tpu.dot_dimension_numbers<[1], [0], [0], [1], [0, 0, 1, 1], [], []>} : vector<16x16xf32>, vector<16x128xf32>, vector<16x128xf32> -> vector<16x128xf32>
    %23 = arith.addf %22, %4 : vector<16x128xf32>
    %cst_19 = arith.constant 0.000000e+00 : f32
    %24 = vector.broadcast %cst_19 : f32 to vector<16x128xf32>
    %25 = arith.maximumf %23, %24 : vector<16x128xf32>
    %c32_20 = arith.constant 32 : index
    %c0_21 = arith.constant 0 : index
    %26 = vector.load %arg3[%c32_20, %c0_21] : memref<96x16xf32, #tpu.memory_space<vmem>>, vector<16x16xf32>
    %cst_22 = arith.constant dense<0.000000e+00> : vector<16x128xf32>
    %27 = tpu.matmul %26, %25, %cst_22 {dimension_numbers = #tpu.dot_dimension_numbers<[1], [0], [0], [1], [0, 0, 1, 1], [], []>} : vector<16x16xf32>, vector<16x128xf32>, vector<16x128xf32> -> vector<16x128xf32>
    %28 = arith.addf %27, %5 : vector<16x128xf32>
    %c0_23 = arith.constant 0 : index
    %c0_24 = arith.constant 0 : index
    %29 = vector.load %arg2[%c0_23, %c0_24] : memref<16x16xf32, #tpu.memory_space<vmem>>, vector<16x16xf32>
    %30 = vector.extract_strided_slice %28 {offsets = [0, 0], sizes = [16, 16], strides = [1, 1]} : vector<16x128xf32> to vector<16x16xf32>
    %cst_25 = arith.constant dense<0.000000e+00> : vector<16x16xf32>
    %31 = tpu.matmul %30, %29, %cst_25 {dimension_numbers = #tpu.dot_dimension_numbers<[1], [0], [0], [1], [0, 0, 1, 1], [], []>} : vector<16x16xf32>, vector<16x16xf32>, vector<16x16xf32> -> vector<16x16xf32>
    %32 = vector.extract_strided_slice %28 {offsets = [0, 16], sizes = [16, 16], strides = [1, 1]} : vector<16x128xf32> to vector<16x16xf32>
    %cst_26 = arith.constant dense<0.000000e+00> : vector<16x16xf32>
    %33 = tpu.matmul %32, %29, %cst_26 {dimension_numbers = #tpu.dot_dimension_numbers<[1], [0], [0], [1], [0, 0, 1, 1], [], []>} : vector<16x16xf32>, vector<16x16xf32>, vector<16x16xf32> -> vector<16x16xf32>
    %34 = vector.extract_strided_slice %28 {offsets = [0, 32], sizes = [16, 16], strides = [1, 1]} : vector<16x128xf32> to vector<16x16xf32>
    %cst_27 = arith.constant dense<0.000000e+00> : vector<16x16xf32>
    %35 = tpu.matmul %34, %29, %cst_27 {dimension_numbers = #tpu.dot_dimension_numbers<[1], [0], [0], [1], [0, 0, 1, 1], [], []>} : vector<16x16xf32>, vector<16x16xf32>, vector<16x16xf32> -> vector<16x16xf32>
    %36 = vector.extract_strided_slice %28 {offsets = [0, 48], sizes = [16, 16], strides = [1, 1]} : vector<16x128xf32> to vector<16x16xf32>
    %cst_28 = arith.constant dense<0.000000e+00> : vector<16x16xf32>
    %37 = tpu.matmul %36, %29, %cst_28 {dimension_numbers = #tpu.dot_dimension_numbers<[1], [0], [0], [1], [0, 0, 1, 1], [], []>} : vector<16x16xf32>, vector<16x16xf32>, vector<16x16xf32> -> vector<16x16xf32>
    %38 = vector.extract_strided_slice %28 {offsets = [0, 64], sizes = [16, 16], strides = [1, 1]} : vector<16x128xf32> to vector<16x16xf32>
    %cst_29 = arith.constant dense<0.000000e+00> : vector<16x16xf32>
    %39 = tpu.matmul %38, %29, %cst_29 {dimension_numbers = #tpu.dot_dimension_numbers<[1], [0], [0], [1], [0, 0, 1, 1], [], []>} : vector<16x16xf32>, vector<16x16xf32>, vector<16x16xf32> -> vector<16x16xf32>
    %40 = vector.extract_strided_slice %28 {offsets = [0, 80], sizes = [16, 16], strides = [1, 1]} : vector<16x128xf32> to vector<16x16xf32>
    %cst_30 = arith.constant dense<0.000000e+00> : vector<16x16xf32>
    %41 = tpu.matmul %40, %29, %cst_30 {dimension_numbers = #tpu.dot_dimension_numbers<[1], [0], [0], [1], [0, 0, 1, 1], [], []>} : vector<16x16xf32>, vector<16x16xf32>, vector<16x16xf32> -> vector<16x16xf32>
    %42 = vector.extract_strided_slice %28 {offsets = [0, 96], sizes = [16, 16], strides = [1, 1]} : vector<16x128xf32> to vector<16x16xf32>
    %cst_31 = arith.constant dense<0.000000e+00> : vector<16x16xf32>
    %43 = tpu.matmul %42, %29, %cst_31 {dimension_numbers = #tpu.dot_dimension_numbers<[1], [0], [0], [1], [0, 0, 1, 1], [], []>} : vector<16x16xf32>, vector<16x16xf32>, vector<16x16xf32> -> vector<16x16xf32>
    %44 = vector.extract_strided_slice %28 {offsets = [0, 112], sizes = [16, 16], strides = [1, 1]} : vector<16x128xf32> to vector<16x16xf32>
    %cst_32 = arith.constant dense<0.000000e+00> : vector<16x16xf32>
    %45 = tpu.matmul %44, %29, %cst_32 {dimension_numbers = #tpu.dot_dimension_numbers<[1], [0], [0], [1], [0, 0, 1, 1], [], []>} : vector<16x16xf32>, vector<16x16xf32>, vector<16x16xf32> -> vector<16x16xf32>
    %46 = tpu.concatenate %31, %33, %35, %37, %39, %41, %43, %45 in 1 : vector<16x16xf32>, vector<16x16xf32>, vector<16x16xf32>, vector<16x16xf32>, vector<16x16xf32>, vector<16x16xf32>, vector<16x16xf32>, vector<16x16xf32> -> vector<16x128xf32>
    %c48_33 = arith.constant 48 : index
    %c0_34 = arith.constant 0 : index
    %47 = vector.load %arg3[%c48_33, %c0_34] : memref<96x16xf32, #tpu.memory_space<vmem>>, vector<16x16xf32>
    %cst_35 = arith.constant dense<0.000000e+00> : vector<16x128xf32>
    %48 = tpu.matmul %47, %46, %cst_35 {dimension_numbers = #tpu.dot_dimension_numbers<[1], [0], [0], [1], [0, 0, 1, 1], [], []>} : vector<16x16xf32>, vector<16x128xf32>, vector<16x128xf32> -> vector<16x128xf32>
    %49 = arith.addf %48, %6 : vector<16x128xf32>
    %cst_36 = arith.constant 0.000000e+00 : f32
    %50 = vector.broadcast %cst_36 : f32 to vector<16x128xf32>
    %51 = arith.maximumf %49, %50 : vector<16x128xf32>
    %c64_37 = arith.constant 64 : index
    %c0_38 = arith.constant 0 : index
    %52 = vector.load %arg3[%c64_37, %c0_38] : memref<96x16xf32, #tpu.memory_space<vmem>>, vector<16x16xf32>
    %cst_39 = arith.constant dense<0.000000e+00> : vector<16x128xf32>
    %53 = tpu.matmul %52, %51, %cst_39 {dimension_numbers = #tpu.dot_dimension_numbers<[1], [0], [0], [1], [0, 0, 1, 1], [], []>} : vector<16x16xf32>, vector<16x128xf32>, vector<16x128xf32> -> vector<16x128xf32>
    %54 = arith.addf %53, %7 : vector<16x128xf32>
    %cst_40 = arith.constant 0.000000e+00 : f32
    %55 = vector.broadcast %cst_40 : f32 to vector<16x128xf32>
    %56 = arith.maximumf %54, %55 : vector<16x128xf32>
    %c80_41 = arith.constant 80 : index
    %c0_42 = arith.constant 0 : index
    %57 = vector.load %arg3[%c80_41, %c0_42] : memref<96x16xf32, #tpu.memory_space<vmem>>, vector<16x16xf32>
    %cst_43 = arith.constant dense<0.000000e+00> : vector<16x128xf32>
    %58 = tpu.matmul %57, %56, %cst_43 {dimension_numbers = #tpu.dot_dimension_numbers<[1], [0], [0], [1], [0, 0, 1, 1], [], []>} : vector<16x16xf32>, vector<16x128xf32>, vector<16x128xf32> -> vector<16x128xf32>
    %59 = arith.addf %58, %8 : vector<16x128xf32>
    %cst_44 = arith.constant 0.000000e+00 : f32
    %60 = vector.broadcast %cst_44 : f32 to vector<16x128xf32>
    %61 = arith.maximumf %59, %60 : vector<16x128xf32>
    %62 = arith.mulf %9, %61 : vector<16x128xf32>
    %cst_45 = arith.constant dense<0.000000e+00> : vector<128xf32>
    %63 = vector.multi_reduction <add>, %62, %cst_45 [0] : vector<16x128xf32> to vector<128xf32>
    %64 = vector.shape_cast %63 : vector<128xf32> to vector<1x128xf32>
    %65 = arith.addf %64, %10 : vector<1x128xf32>
    %66 = arith.subf %0, %65 : vector<1x128xf32>
    %67 = arith.mulf %66, %66 : vector<1x128xf32>
    %c0_46 = arith.constant 0 : index
    %c0_47 = arith.constant 0 : index
    %68 = vector.load %arg5[%c0_46, %c0_47] : memref<1x128xf32, #tpu.memory_space<vmem>>, vector<1x128xf32>
    tpu.vector_store %arg5[%c0_46, %c0_47], %67 {strides = array<i32>} : memref<1x128xf32, #tpu.memory_space<vmem>>, vector<1x128xf32>,
    return
  }
  func.func @transform_0(%arg0: i32) -> (i32, i32) {
    %c0_i32 = arith.constant 0 : i32
    %c0_i32_0 = arith.constant 0 : i32
    return %c0_i32, %arg0 : i32, i32
  }
  func.func @transform_1(%arg0: i32) -> (i32, i32) {
    %c0_i32 = arith.constant 0 : i32
    %c0_i32_0 = arith.constant 0 : i32
    %c0_i32_1 = arith.constant 0 : i32
    return %c0_i32, %c0_i32_0 : i32, i32
  }
  func.func @transform_2(%arg0: i32) -> (i32, i32) {
    %c0_i32 = arith.constant 0 : i32
    %c0_i32_0 = arith.constant 0 : i32
    %c0_i32_1 = arith.constant 0 : i32
    return %c0_i32, %c0_i32_0 : i32, i32
  }
  func.func @transform_3(%arg0: i32) -> (i32, i32) {
    %c0_i32 = arith.constant 0 : i32
    %c0_i32_0 = arith.constant 0 : i32
    %c0_i32_1 = arith.constant 0 : i32
    return %c0_i32, %c0_i32_0 : i32, i32
  }
  func.func @transform_4(%arg0: i32) -> (i32, i32) {
    %c0_i32 = arith.constant 0 : i32
    %c0_i32_0 = arith.constant 0 : i32
    return %c0_i32, %arg0 : i32, i32
  }
}

</mosaic_0001>

<llo_original>
// kernel: _autoencoder_forward.1
$region0: #{_autoencoder_forward.1}
  #allocation0 [shape = 'u32[]', space=smem, size = 0x4, offset = 0x4, fixed_abs, tag = 'smem constant byte address 0x4 - core index']
  #allocation1 [shape = 'u32[144,128]{1,0:T(1,128)}', space=vmem, size = 0x12000, scoped, tag = 'internal scratch']
  %s0 = inlined_call_operand.vmem [shape: f32[1,128], index: 0, kind: input, shape index: {}]
  %s1 = inlined_call_operand.vmem [shape: f32[16,16], index: 1, kind: input, shape index: {}]
  %s2 = inlined_call_operand.vmem [shape: f32[96,16], index: 2, kind: input, shape index: {}]
  %s3 = inlined_call_operand.vmem [shape: f32[152,128], index: 3, kind: input, shape index: {}]
  %s4 = inlined_call_operand.vmem [shape: f32[1,128], index: 4, kind: output, shape index: {}]
  %s5 = sld [smem:[#allocation0]]
  $region26: #{_autoencoder_forward.1} parent=0
    _
  %s7 = ssub.s32 1, %s5
  %s8 = scalar_select 0, %s7, %s5
  // Predicated region
  $region2: #{_autoencoder_forward.1} parent=0 // pred_check
    _
  $region3: #{_autoencoder_forward.1} parent=0 // pred_check_branch
    %10 = sbr.rel (0) target = $region5
  $region4: #{_autoencoder_forward.1} parent=0 // pred_region
    _
  $region5: #{_autoencoder_forward.1} parent=0 // pred_fallthru
    _
  // Predicated region
  $region6: #{_autoencoder_forward.1} parent=0 // pred_check
    _
  $region7: #{_autoencoder_forward.1} parent=0 // pred_check_branch
    %12 = sbr.rel (0) target = $region9
  $region8: #{_autoencoder_forward.1} parent=0 // pred_region
    _
  $region9: #{_autoencoder_forward.1} parent=0 // pred_fallthru
    _
  // Predicated region
  $region10: #{_autoencoder_forward.1} parent=0 // pred_check
    _
  $region11: #{_autoencoder_forward.1} parent=0 // pred_check_branch
    %14 = sbr.rel (0) target = $region13
  $region12: #{_autoencoder_forward.1} parent=0 // pred_region
    _
  $region13: #{_autoencoder_forward.1} parent=0 // pred_fallthru
    _
  // Predicated region
  $region14: #{_autoencoder_forward.1} parent=0 // pred_check
    _
  $region15: #{_autoencoder_forward.1} parent=0 // pred_check_branch
    %16 = sbr.rel (0) target = $region17
  $region16: #{_autoencoder_forward.1} parent=0 // pred_region
    _
  $region17: #{_autoencoder_forward.1} parent=0 // pred_fallthru
    _
  %v17 = vld [vmem:[%s0] sm:$0x1]
  %v18 = vld [vmem:[%s3] sm:$0xff]
  %v19 = vld [vmem:[%s3 + $0x8] sm:$0xff]
  %v20 = vld [vmem:[%s3 + $0x10] sm:$0xff]
  %v21 = vld [vmem:[%s3 + $0x18] sm:$0xff]
  %v22 = vld [vmem:[%s3 + $0x20] sm:$0xff]
  %v23 = vld [vmem:[%s3 + $0x28] sm:$0xff]
  %v24 = vld [vmem:[%s3 + $0x30] sm:$0xff]
  %v25 = vld [vmem:[%s3 + $0x38] sm:$0xff]
  %v26 = vld [vmem:[%s3 + $0x40] sm:$0xff]
  %v27 = vld [vmem:[%s3 + $0x48] sm:$0xff]
  %v28 = vld [vmem:[%s3 + $0x50] sm:$0xff]
  %v29 = vld [vmem:[%s3 + $0x58] sm:$0xff]
  %v30 = vld [vmem:[%s3 + $0x60] sm:$0xff]
  %v31 = vld [vmem:[%s3 + $0x68] sm:$0xff]
  %v32 = vld [vmem:[%s3 + $0x70] sm:$0xff]
  %v33 = vld [vmem:[%s3 + $0x78] sm:$0xff]
  %v34 = vld [vmem:[%s3 + $0x80] sm:$0xff]
  %v35 = vld [vmem:[%s3 + $0x88] sm:$0xff]
  %v36 = vld [vmem:[%s3 + $0x90] sm:$0x1]
  %v38 = vlaneseq
  %v39 = vshrl.u32 %v38, 7
  %v40 = vsub.s32 0, %v39
  %v41 = vrot.slane %v17, %v40
  %v43 = vmul.f32 %v18, %v41
  %v44 = vmul.f32 %v19, %v41
  %v45 = vadd.f32 %v43, %v20
  %v46 = vadd.f32 %v44, %v21
  %v47 = vmax.f32 %v45, 0.0
  %v48 = vmax.f32 %v46, 0.0
  %v49 = vld [vmem:[%s2] sm:$0xff]
  %v50 = vld [vmem:[%s2 + $0x8] sm:$0xff]
  %vm51 = vcmask 130048
  %v53 = vsel %vm51, %v49, 0
  %v56 = vsel %vm51, %v50, 0
  %58 = vmatprep.subr.mxu0 0.0
  %59 = vmatpush1.msra.mxu0 %v47
  %60 = vmatprep.subr.mxu0 0.0
  %61 = vmatpush1.msra.mxu0 %v48
  %62 = vmatprep.subr.mxu0 0.0
  %63 = vmatpush1.msra.mxu0 0.0
  %64 = vmatprep.subr.mxu0 0.0
  %65 = vmatpush1.msra.mxu0 0.0
  %66 = vmatprep.subr.mxu0 0.0
  %67 = vmatpush1.msra.mxu0 0.0
  %68 = vmatprep.subr.mxu0 0.0
  %69 = vmatpush1.msra.mxu0 0.0
  %70 = vmatprep.subr.mxu0 0.0
  %71 = vmatpush1.msra.mxu0 0.0
  %72 = vmatprep.subr.mxu0 0.0
  %73 = vmatpush1.msra.mxu0 0.0
  %74 = vmatprep.subr.mxu0 0.0
  %75 = vmatpush1.msra.mxu0 0.0
  %76 = vmatprep.subr.mxu0 0.0
  %77 = vmatpush1.msra.mxu0 0.0
  %78 = vmatprep.subr.mxu0 0.0
  %79 = vmatpush1.msra.mxu0 0.0
  %80 = vmatprep.subr.mxu0 0.0
  %81 = vmatpush1.msra.mxu0 0.0
  %82 = vmatprep.subr.mxu0 0.0
  %83 = vmatpush1.msra.mxu0 0.0
  %84 = vmatprep.subr.mxu0 0.0
  %85 = vmatpush1.msra.mxu0 0.0
  %86 = vmatprep.subr.mxu0 0.0
  %87 = vmatpush1.msra.mxu0 0.0
  %88 = vmatprep.subr.mxu0 0.0
  %89 = vmatpush1.msra.mxu0 0.0
  %90 = vmatprep.subr.mxu0 0.0
  %91 = vmatpush1.msra.mxu0 0.0
  %92 = vmatprep.subr.mxu0 0.0
  %93 = vmatpush1.msra.mxu0 0.0
  %94 = vmatprep.subr.mxu0 0.0
  %95 = vmatpush1.msra.mxu0 0.0
  %96 = vmatprep.subr.mxu0 0.0
  %97 = vmatpush1.msra.mxu0 0.0
  %98 = vmatprep.subr.mxu0 0.0
  %99 = vmatpush1.msra.mxu0 0.0
  %100 = vmatprep.subr.mxu0 0.0
  %101 = vmatpush1.msra.mxu0 0.0
  %102 = vmatprep.subr.mxu0 0.0
  %103 = vmatpush1.msra.mxu0 0.0
  %104 = vmatprep.subr.mxu0 0.0
  %105 = vmatpush1.msra.mxu0 0.0
  %106 = vmatprep.subr.mxu0 0.0
  %107 = vmatpush1.msra.mxu0 0.0
  %108 = vmatprep.subr.mxu0 0.0
  %109 = vmatpush1.msra.mxu0 0.0
  %110 = vmatprep.subr.mxu0 0.0
  %111 = vmatpush1.msra.mxu0 0.0
  %112 = vmatprep.subr.mxu0 0.0
  %113 = vmatpush1.msra.mxu0 0.0
  %114 = vmatprep.subr.mxu0 0.0
  %115 = vmatpush1.msra.mxu0 0.0
  %116 = vmatprep.subr.mxu0 0.0
  %117 = vmatpush1.msra.mxu0 0.0
  %118 = vmatprep.subr.mxu0 0.0
  %119 = vmatpush1.msra.mxu0 0.0
  %120 = vmatprep.subr.mxu0 0.0
  %121 = vmatpush1.msra.mxu0 0.0
  %122 = vmatprep.mubr.f32.mxu0 0.0
  %123 = vmatmul.mubr.f32.gmra.mrb[0].mxu0 %v53
  %v124 = vpop.f32.mrb[0].mxu0
  %v125 = vadd.f32 %v22, %v124
  %v126 = vpop.f32.mrb[0].mxu0
  %127 = vmatprep.mubr.f32.mxu0 0.0
  %128 = vmatmul.mubr.f32.gmra.mrb[0].mxu0 %v56
  %v129 = vpop.f32.mrb[0].mxu0
  %v130 = vadd.f32 %v23, %v129
  %v131 = vpop.f32.mrb[0].mxu0
  %132 = vdwg.mxu0
  %v133 = vmax.f32 %v125, 0.0
  %v134 = vmax.f32 %v130, 0.0
  %v135 = vld [vmem:[%s2 + $0x10] sm:$0xff]
  %v136 = vld [vmem:[%s2 + $0x18] sm:$0xff]
  %v138 = vsel %vm51, %v135, 0
  %v141 = vsel %vm51, %v136, 0
  %143 = vmatprep.subr.mxu0 0.0
  %144 = vmatpush1.msra.mxu0 %v133
  %145 = vmatprep.subr.mxu0 0.0
  %146 = vmatpush1.msra.mxu0 %v134
  %147 = vmatprep.subr.mxu0 0.0
  %148 = vmatpush1.msra.mxu0 0.0
  %149 = vmatprep.subr.mxu0 0.0
  %150 = vmatpush1.msra.mxu0 0.0
  %151 = vmatprep.subr.mxu0 0.0
  %152 = vmatpush1.msra.mxu0 0.0
  %153 = vmatprep.subr.mxu0 0.0
  %154 = vmatpush1.msra.mxu0 0.0
  %155 = vmatprep.subr.mxu0 0.0
  %156 = vmatpush1.msra.mxu0 0.0
  %157 = vmatprep.subr.mxu0 0.0
  %158 = vmatpush1.msra.mxu0 0.0
  %159 = vmatprep.subr.mxu0 0.0
  %160 = vmatpush1.msra.mxu0 0.0
  %161 = vmatprep.subr.mxu0 0.0
  %162 = vmatpush1.msra.mxu0 0.0
  %163 = vmatprep.subr.mxu0 0.0
  %164 = vmatpush1.msra.mxu0 0.0
  %165 = vmatprep.subr.mxu0 0.0
  %166 = vmatpush1.msra.mxu0 0.0
  %167 = vmatprep.subr.mxu0 0.0
  %168 = vmatpush1.msra.mxu0 0.0
  %169 = vmatprep.subr.mxu0 0.0
  %170 = vmatpush1.msra.mxu0 0.0
  %171 = vmatprep.subr.mxu0 0.0
  %172 = vmatpush1.msra.mxu0 0.0
  %173 = vmatprep.subr.mxu0 0.0
  %174 = vmatpush1.msra.mxu0 0.0
  %175 = vmatprep.subr.mxu0 0.0
  %176 = vmatpush1.msra.mxu0 0.0
  %177 = vmatprep.subr.mxu0 0.0
  %178 = vmatpush1.msra.mxu0 0.0
  %179 = vmatprep.subr.mxu0 0.0
  %180 = vmatpush1.msra.mxu0 0.0
  %181 = vmatprep.subr.mxu0 0.0
  %182 = vmatpush1.msra.mxu0 0.0
  %183 = vmatprep.subr.mxu0 0.0
  %184 = vmatpush1.msra.mxu0 0.0
  %185 = vmatprep.subr.mxu0 0.0
  %186 = vmatpush1.msra.mxu0 0.0
  %187 = vmatprep.subr.mxu0 0.0
  %188 = vmatpush1.msra.mxu0 0.0
  %189 = vmatprep.subr.mxu0 0.0
  %190 = vmatpush1.msra.mxu0 0.0
  %191 = vmatprep.subr.mxu0 0.0
  %192 = vmatpush1.msra.mxu0 0.0
  %193 = vmatprep.subr.mxu0 0.0
  %194 = vmatpush1.msra.mxu0 0.0
  %195 = vmatprep.subr.mxu0 0.0
  %196 = vmatpush1.msra.mxu0 0.0
  %197 = vmatprep.subr.mxu0 0.0
  %198 = vmatpush1.msra.mxu0 0.0
  %199 = vmatprep.subr.mxu0 0.0
  %200 = vmatpush1.msra.mxu0 0.0
  %201 = vmatprep.subr.mxu0 0.0
  %202 = vmatpush1.msra.mxu0 0.0
  %203 = vmatprep.subr.mxu0 0.0
  %204 = vmatpush1.msra.mxu0 0.0
  %205 = vmatprep.subr.mxu0 0.0
  %206 = vmatpush1.msra.mxu0 0.0
  %207 = vmatprep.mubr.f32.mxu0 0.0
  %208 = vmatmul.mubr.f32.gmra.mrb[0].mxu0 %v138
  %v209 = vpop.f32.mrb[0].mxu0
  %v210 = vadd.f32 %v24, %v209
  %v211 = vpop.f32.mrb[0].mxu0
  %212 = vmatprep.mubr.f32.mxu0 0.0
  %213 = vmatmul.mubr.f32.gmra.mrb[0].mxu0 %v141
  %v214 = vpop.f32.mrb[0].mxu0
  %v215 = vadd.f32 %v25, %v214
  %v216 = vpop.f32.mrb[0].mxu0
  %217 = vdwg.mxu0
  %v218 = vmax.f32 %v210, 0.0
  %v219 = vmax.f32 %v215, 0.0
  %v220 = vld [vmem:[%s2 + $0x20] sm:$0xff]
  %v221 = vld [vmem:[%s2 + $0x28] sm:$0xff]
  %v223 = vsel %vm51, %v220, 0
  %v226 = vsel %vm51, %v221, 0
  %228 = vmatprep.subr.mxu0 0.0
  %229 = vmatpush1.msra.mxu0 %v218
  %230 = vmatprep.subr.mxu0 0.0
  %231 = vmatpush1.msra.mxu0 %v219
  %232 = vmatprep.subr.mxu0 0.0
  %233 = vmatpush1.msra.mxu0 0.0
  %234 = vmatprep.subr.mxu0 0.0
  %235 = vmatpush1.msra.mxu0 0.0
  %236 = vmatprep.subr.mxu0 0.0
  %237 = vmatpush1.msra.mxu0 0.0
  %238 = vmatprep.subr.mxu0 0.0
  %239 = vmatpush1.msra.mxu0 0.0
  %240 = vmatprep.subr.mxu0 0.0
  %241 = vmatpush1.msra.mxu0 0.0
  %242 = vmatprep.subr.mxu0 0.0
  %243 = vmatpush1.msra.mxu0 0.0
  %244 = vmatprep.subr.mxu0 0.0
  %245 = vmatpush1.msra.mxu0 0.0
  %246 = vmatprep.subr.mxu0 0.0
  %247 = vmatpush1.msra.mxu0 0.0
  %248 = vmatprep.subr.mxu0 0.0
  %249 = vmatpush1.msra.mxu0 0.0
  %250 = vmatprep.subr.mxu0 0.0
  %251 = vmatpush1.msra.mxu0 0.0
  %252 = vmatprep.subr.mxu0 0.0
  %253 = vmatpush1.msra.mxu0 0.0
  %254 = vmatprep.subr.mxu0 0.0
  %255 = vmatpush1.msra.mxu0 0.0
  %256 = vmatprep.subr.mxu0 0.0
  %257 = vmatpush1.msra.mxu0 0.0
  %258 = vmatprep.subr.mxu0 0.0
  %259 = vmatpush1.msra.mxu0 0.0
  %260 = vmatprep.subr.mxu0 0.0
  %261 = vmatpush1.msra.mxu0 0.0
  %262 = vmatprep.subr.mxu0 0.0
  %263 = vmatpush1.msra.mxu0 0.0
  %264 = vmatprep.subr.mxu0 0.0
  %265 = vmatpush1.msra.mxu0 0.0
  %266 = vmatprep.subr.mxu0 0.0
  %267 = vmatpush1.msra.mxu0 0.0
  %268 = vmatprep.subr.mxu0 0.0
  %269 = vmatpush1.msra.mxu0 0.0
  %270 = vmatprep.subr.mxu0 0.0
  %271 = vmatpush1.msra.mxu0 0.0
  %272 = vmatprep.subr.mxu0 0.0
  %273 = vmatpush1.msra.mxu0 0.0
  %274 = vmatprep.subr.mxu0 0.0
  %275 = vmatpush1.msra.mxu0 0.0
  %276 = vmatprep.subr.mxu0 0.0
  %277 = vmatpush1.msra.mxu0 0.0
  %278 = vmatprep.subr.mxu0 0.0
  %279 = vmatpush1.msra.mxu0 0.0
  %280 = vmatprep.subr.mxu0 0.0
  %281 = vmatpush1.msra.mxu0 0.0
  %282 = vmatprep.subr.mxu0 0.0
  %283 = vmatpush1.msra.mxu0 0.0
  %284 = vmatprep.subr.mxu0 0.0
  %285 = vmatpush1.msra.mxu0 0.0
  %286 = vmatprep.subr.mxu0 0.0
  %287 = vmatpush1.msra.mxu0 0.0
  %288 = vmatprep.subr.mxu0 0.0
  %289 = vmatpush1.msra.mxu0 0.0
  %290 = vmatprep.subr.mxu0 0.0
  %291 = vmatpush1.msra.mxu0 0.0
  %292 = vmatprep.mubr.f32.mxu0 0.0
  %293 = vmatmul.mubr.f32.gmra.mrb[0].mxu0 %v223
  %v294 = vpop.f32.mrb[0].mxu0
  %v295 = vadd.f32 %v26, %v294
  %v296 = vpop.f32.mrb[0].mxu0
  %297 = vmatprep.mubr.f32.mxu0 0.0
  %298 = vmatmul.mubr.f32.gmra.mrb[0].mxu0 %v226
  %v299 = vpop.f32.mrb[0].mxu0
  %v300 = vadd.f32 %v27, %v299
  %v301 = vpop.f32.mrb[0].mxu0
  %302 = vdwg.mxu0
  %v303 = vld [vmem:[%s1] sm:$0xff]
  %v304 = vld [vmem:[%s1 + $0x8] sm:$0xff]
  %v306 = vsel %vm51, %v295, 0
  %v309 = vsel %vm51, %v300, 0
  %311 = vmatprep.subr.mxu0 0.0
  %312 = vmatpush1.msra.mxu0 %v303
  %313 = vmatprep.subr.mxu0 0.0
  %314 = vmatpush1.msra.mxu0 %v304
  %315 = vmatprep.subr.mxu0 0.0
  %316 = vmatpush1.msra.mxu0 0.0
  %317 = vmatprep.subr.mxu0 0.0
  %318 = vmatpush1.msra.mxu0 0.0
  %319 = vmatprep.subr.mxu0 0.0
  %320 = vmatpush1.msra.mxu0 0.0
  %321 = vmatprep.subr.mxu0 0.0
  %322 = vmatpush1.msra.mxu0 0.0
  %323 = vmatprep.subr.mxu0 0.0
  %324 = vmatpush1.msra.mxu0 0.0
  %325 = vmatprep.subr.mxu0 0.0
  %326 = vmatpush1.msra.mxu0 0.0
  %327 = vmatprep.subr.mxu0 0.0
  %328 = vmatpush1.msra.mxu0 0.0
  %329 = vmatprep.subr.mxu0 0.0
  %330 = vmatpush1.msra.mxu0 0.0
  %331 = vmatprep.subr.mxu0 0.0
  %332 = vmatpush1.msra.mxu0 0.0
  %333 = vmatprep.subr.mxu0 0.0
  %334 = vmatpush1.msra.mxu0 0.0
  %335 = vmatprep.subr.mxu0 0.0
  %336 = vmatpush1.msra.mxu0 0.0
  %337 = vmatprep.subr.mxu0 0.0
  %338 = vmatpush1.msra.mxu0 0.0
  %339 = vmatprep.subr.mxu0 0.0
  %340 = vmatpush1.msra.mxu0 0.0
  %341 = vmatprep.subr.mxu0 0.0
  %342 = vmatpush1.msra.mxu0 0.0
  %343 = vmatprep.subr.mxu0 0.0
  %344 = vmatpush1.msra.mxu0 0.0
  %345 = vmatprep.subr.mxu0 0.0
  %346 = vmatpush1.msra.mxu0 0.0
  %347 = vmatprep.subr.mxu0 0.0
  %348 = vmatpush1.msra.mxu0 0.0
  %349 = vmatprep.subr.mxu0 0.0
  %350 = vmatpush1.msra.mxu0 0.0
  %351 = vmatprep.subr.mxu0 0.0
  %352 = vmatpush1.msra.mxu0 0.0
  %353 = vmatprep.subr.mxu0 0.0
  %354 = vmatpush1.msra.mxu0 0.0
  %355 = vmatprep.subr.mxu0 0.0
  %356 = vmatpush1.msra.mxu0 0.0
  %357 = vmatprep.subr.mxu0 0.0
  %358 = vmatpush1.msra.mxu0 0.0
  %359 = vmatprep.subr.mxu0 0.0
  %360 = vmatpush1.msra.mxu0 0.0
  %361 = vmatprep.subr.mxu0 0.0
  %362 = vmatpush1.msra.mxu0 0.0
  %363 = vmatprep.subr.mxu0 0.0
  %364 = vmatpush1.msra.mxu0 0.0
  %365 = vmatprep.subr.mxu0 0.0
  %366 = vmatpush1.msra.mxu0 0.0
  %367 = vmatprep.subr.mxu0 0.0
  %368 = vmatpush1.msra.mxu0 0.0
  %369 = vmatprep.subr.mxu0 0.0
  %370 = vmatpush1.msra.mxu0 0.0
  %371 = vmatprep.subr.mxu0 0.0
  %372 = vmatpush1.msra.mxu0 0.0
  %373 = vmatprep.subr.mxu0 0.0
  %374 = vmatpush1.msra.mxu0 0.0
  %375 = vmatprep.mubr.f32.mxu0 0.0
  %376 = vmatmul.mubr.f32.gmra.mrb[0].mxu0 %v306
  %v377 = vpop.f32.mrb[0].mxu0
  %v378 = vadd.f32 0.0, %v377
  %v379 = vpop.f32.mrb[0].mxu0
  %380 = vmatprep.mubr.f32.mxu0 0.0
  %381 = vmatmul.mubr.f32.gmra.mrb[0].mxu0 %v309
  %v382 = vpop.f32.mrb[0].mxu0
  %v383 = vadd.f32 0.0, %v382
  %v384 = vpop.f32.mrb[0].mxu0
  %385 = vdwg.mxu0
  %386 = vrot.lane.b32.xlu0 %v295, 112
  %v387 = vpop.permute.xlu0 %386
  %388 = vrot.lane.b32.xlu0 %v300, 112
  %v389 = vpop.permute.xlu0 %388
  %v390 = vsel %vm51, %v387, 0
  %v392 = vsel %vm51, %v389, 0
  %394 = vmatprep.subr.mxu0 0.0
  %395 = vmatpush1.msra.mxu0 %v303
  %396 = vmatprep.subr.mxu0 0.0
  %397 = vmatpush1.msra.mxu0 %v304
  %398 = vmatprep.subr.mxu0 0.0
  %399 = vmatpush1.msra.mxu0 0.0
  %400 = vmatprep.subr.mxu0 0.0
  %401 = vmatpush1.msra.mxu0 0.0
  %402 = vmatprep.subr.mxu0 0.0
  %403 = vmatpush1.msra.mxu0 0.0
  %404 = vmatprep.subr.mxu0 0.0
  %405 = vmatpush1.msra.mxu0 0.0
  %406 = vmatprep.subr.mxu0 0.0
  %407 = vmatpush1.msra.mxu0 0.0
  %408 = vmatprep.subr.mxu0 0.0
  %409 = vmatpush1.msra.mxu0 0.0
  %410 = vmatprep.subr.mxu0 0.0
  %411 = vmatpush1.msra.mxu0 0.0
  %412 = vmatprep.subr.mxu0 0.0
  %413 = vmatpush1.msra.mxu0 0.0
  %414 = vmatprep.subr.mxu0 0.0
  %415 = vmatpush1.msra.mxu0 0.0
  %416 = vmatprep.subr.mxu0 0.0
  %417 = vmatpush1.msra.mxu0 0.0
  %418 = vmatprep.subr.mxu0 0.0
  %419 = vmatpush1.msra.mxu0 0.0
  %420 = vmatprep.subr.mxu0 0.0
  %421 = vmatpush1.msra.mxu0 0.0
  %422 = vmatprep.subr.mxu0 0.0
  %423 = vmatpush1.msra.mxu0 0.0
  %424 = vmatprep.subr.mxu0 0.0
  %425 = vmatpush1.msra.mxu0 0.0
  %426 = vmatprep.subr.mxu0 0.0
  %427 = vmatpush1.msra.mxu0 0.0
  %428 = vmatprep.subr.mxu0 0.0
  %429 = vmatpush1.msra.mxu0 0.0
  %430 = vmatprep.subr.mxu0 0.0
  %431 = vmatpush1.msra.mxu0 0.0
  %432 = vmatprep.subr.mxu0 0.0
  %433 = vmatpush1.msra.mxu0 0.0
  %434 = vmatprep.subr.mxu0 0.0
  %435 = vmatpush1.msra.mxu0 0.0
  %436 = vmatprep.subr.mxu0 0.0
  %437 = vmatpush1.msra.mxu0 0.0
  %438 = vmatprep.subr.mxu0 0.0
  %439 = vmatpush1.msra.mxu0 0.0
  %440 = vmatprep.subr.mxu0 0.0
  %441 = vmatpush1.msra.mxu0 0.0
  %442 = vmatprep.subr.mxu0 0.0
  %443 = vmatpush1.msra.mxu0 0.0
  %444 = vmatprep.subr.mxu0 0.0
  %445 = vmatpush1.msra.mxu0 0.0
  %446 = vmatprep.subr.mxu0 0.0
  %447 = vmatpush1.msra.mxu0 0.0
  %448 = vmatprep.subr.mxu0 0.0
  %449 = vmatpush1.msra.mxu0 0.0
  %450 = vmatprep.subr.mxu0 0.0
  %451 = vmatpush1.msra.mxu0 0.0
  %452 = vmatprep.subr.mxu0 0.0
  %453 = vmatpush1.msra.mxu0 0.0
  %454 = vmatprep.subr.mxu0 0.0
  %455 = vmatpush1.msra.mxu0 0.0
  %456 = vmatprep.subr.mxu0 0.0
  %457 = vmatpush1.msra.mxu0 0.0
  %458 = vmatprep.mubr.f32.mxu0 0.0
  %459 = vmatmul.mubr.f32.gmra.mrb[0].mxu0 %v390
  %v460 = vpop.f32.mrb[0].mxu0
  %v461 = vadd.f32 0.0, %v460
  %v462 = vpop.f32.mrb[0].mxu0
  %463 = vmatprep.mubr.f32.mxu0 0.0
  %464 = vmatmul.mubr.f32.gmra.mrb[0].mxu0 %v392
  %v465 = vpop.f32.mrb[0].mxu0
  %v466 = vadd.f32 0.0, %v465
  %v467 = vpop.f32.mrb[0].mxu0
  %468 = vdwg.mxu0
  %469 = vrot.lane.b32.xlu0 %v295, 96
  %v470 = vpop.permute.xlu0 %469
  %471 = vrot.lane.b32.xlu0 %v300, 96
  %v472 = vpop.permute.xlu0 %471
  %v473 = vsel %vm51, %v470, 0
  %v475 = vsel %vm51, %v472, 0
  %477 = vmatprep.subr.mxu0 0.0
  %478 = vmatpush1.msra.mxu0 %v303
  %479 = vmatprep.subr.mxu0 0.0
  %480 = vmatpush1.msra.mxu0 %v304
  %481 = vmatprep.subr.mxu0 0.0
  %482 = vmatpush1.msra.mxu0 0.0
  %483 = vmatprep.subr.mxu0 0.0
  %484 = vmatpush1.msra.mxu0 0.0
  %485 = vmatprep.subr.mxu0 0.0
  %486 = vmatpush1.msra.mxu0 0.0
  %487 = vmatprep.subr.mxu0 0.0
  %488 = vmatpush1.msra.mxu0 0.0
  %489 = vmatprep.subr.mxu0 0.0
  %490 = vmatpush1.msra.mxu0 0.0
  %491 = vmatprep.subr.mxu0 0.0
  %492 = vmatpush1.msra.mxu0 0.0
  %493 = vmatprep.subr.mxu0 0.0
  %494 = vmatpush1.msra.mxu0 0.0
  %495 = vmatprep.subr.mxu0 0.0
  %496 = vmatpush1.msra.mxu0 0.0
  %497 = vmatprep.subr.mxu0 0.0
  %498 = vmatpush1.msra.mxu0 0.0
  %499 = vmatprep.subr.mxu0 0.0
  %500 = vmatpush1.msra.mxu0 0.0
  %501 = vmatprep.subr.mxu0 0.0
  %502 = vmatpush1.msra.mxu0 0.0
  %503 = vmatprep.subr.mxu0 0.0
  %504 = vmatpush1.msra.mxu0 0.0
  %505 = vmatprep.subr.mxu0 0.0
  %506 = vmatpush1.msra.mxu0 0.0
  %507 = vmatprep.subr.mxu0 0.0
  %508 = vmatpush1.msra.mxu0 0.0
  %509 = vmatprep.subr.mxu0 0.0
  %510 = vmatpush1.msra.mxu0 0.0
  %511 = vmatprep.subr.mxu0 0.0
  %512 = vmatpush1.msra.mxu0 0.0
  %513 = vmatprep.subr.mxu0 0.0
  %514 = vmatpush1.msra.mxu0 0.0
  %515 = vmatprep.subr.mxu0 0.0
  %516 = vmatpush1.msra.mxu0 0.0
  %517 = vmatprep.subr.mxu0 0.0
  %518 = vmatpush1.msra.mxu0 0.0
  %519 = vmatprep.subr.mxu0 0.0
  %520 = vmatpush1.msra.mxu0 0.0
  %521 = vmatprep.subr.mxu0 0.0
  %522 = vmatpush1.msra.mxu0 0.0
  %523 = vmatprep.subr.mxu0 0.0
  %524 = vmatpush1.msra.mxu0 0.0
  %525 = vmatprep.subr.mxu0 0.0
  %526 = vmatpush1.msra.mxu0 0.0
  %527 = vmatprep.subr.mxu0 0.0
  %528 = vmatpush1.msra.mxu0 0.0
  %529 = vmatprep.subr.mxu0 0.0
  %530 = vmatpush1.msra.mxu0 0.0
  %531 = vmatprep.subr.mxu0 0.0
  %532 = vmatpush1.msra.mxu0 0.0
  %533 = vmatprep.subr.mxu0 0.0
  %534 = vmatpush1.msra.mxu0 0.0
  %535 = vmatprep.subr.mxu0 0.0
  %536 = vmatpush1.msra.mxu0 0.0
  %537 = vmatprep.subr.mxu0 0.0
  %538 = vmatpush1.msra.mxu0 0.0
  %539 = vmatprep.subr.mxu0 0.0
  %540 = vmatpush1.msra.mxu0 0.0
  %541 = vmatprep.mubr.f32.mxu0 0.0
  %542 = vmatmul.mubr.f32.gmra.mrb[0].mxu0 %v473
  %v543 = vpop.f32.mrb[0].mxu0
  %v544 = vadd.f32 0.0, %v543
  %v545 = vpop.f32.mrb[0].mxu0
  %546 = vmatprep.mubr.f32.mxu0 0.0
  %547 = vmatmul.mubr.f32.gmra.mrb[0].mxu0 %v475
  %v548 = vpop.f32.mrb[0].mxu0
  %v549 = vadd.f32 0.0, %v548
  %v550 = vpop.f32.mrb[0].mxu0
  %551 = vdwg.mxu0
  %552 = vrot.lane.b32.xlu0 %v295, 80
  %v553 = vpop.permute.xlu0 %552
  %554 = vrot.lane.b32.xlu0 %v300, 80
  %v555 = vpop.permute.xlu0 %554
  %v556 = vsel %vm51, %v553, 0
  %v558 = vsel %vm51, %v555, 0
  %560 = vmatprep.subr.mxu0 0.0
  %561 = vmatpush1.msra.mxu0 %v303
  %562 = vmatprep.subr.mxu0 0.0
  %563 = vmatpush1.msra.mxu0 %v304
  %564 = vmatprep.subr.mxu0 0.0
  %565 = vmatpush1.msra.mxu0 0.0
  %566 = vmatprep.subr.mxu0 0.0
  %567 = vmatpush1.msra.mxu0 0.0
  %568 = vmatprep.subr.mxu0 0.0
  %569 = vmatpush1.msra.mxu0 0.0
  %570 = vmatprep.subr.mxu0 0.0
  %571 = vmatpush1.msra.mxu0 0.0
  %572 = vmatprep.subr.mxu0 0.0
  %573 = vmatpush1.msra.mxu0 0.0
  %574 = vmatprep.subr.mxu0 0.0
  %575 = vmatpush1.msra.mxu0 0.0
  %576 = vmatprep.subr.mxu0 0.0
  %577 = vmatpush1.msra.mxu0 0.0
  %578 = vmatprep.subr.mxu0 0.0
  %579 = vmatpush1.msra.mxu0 0.0
  %580 = vmatprep.subr.mxu0 0.0
  %581 = vmatpush1.msra.mxu0 0.0
  %582 = vmatprep.subr.mxu0 0.0
  %583 = vmatpush1.msra.mxu0 0.0
  %584 = vmatprep.subr.mxu0 0.0
  %585 = vmatpush1.msra.mxu0 0.0
  %586 = vmatprep.subr.mxu0 0.0
  %587 = vmatpush1.msra.mxu0 0.0
  %588 = vmatprep.subr.mxu0 0.0
  %589 = vmatpush1.msra.mxu0 0.0
  %590 = vmatprep.subr.mxu0 0.0
  %591 = vmatpush1.msra.mxu0 0.0
  %592 = vmatprep.subr.mxu0 0.0
  %593 = vmatpush1.msra.mxu0 0.0
  %594 = vmatprep.subr.mxu0 0.0
  %595 = vmatpush1.msra.mxu0 0.0
  %596 = vmatprep.subr.mxu0 0.0
  %597 = vmatpush1.msra.mxu0 0.0
  %598 = vmatprep.subr.mxu0 0.0
  %599 = vmatpush1.msra.mxu0 0.0
  %600 = vmatprep.subr.mxu0 0.0
  %601 = vmatpush1.msra.mxu0 0.0
  %602 = vmatprep.subr.mxu0 0.0
  %603 = vmatpush1.msra.mxu0 0.0
  %604 = vmatprep.subr.mxu0 0.0
  %605 = vmatpush1.msra.mxu0 0.0
  %606 = vmatprep.subr.mxu0 0.0
  %607 = vmatpush1.msra.mxu0 0.0
  %608 = vmatprep.subr.mxu0 0.0
  %609 = vmatpush1.msra.mxu0 0.0
  %610 = vmatprep.subr.mxu0 0.0
  %611 = vmatpush1.msra.mxu0 0.0
  %612 = vmatprep.subr.mxu0 0.0
  %613 = vmatpush1.msra.mxu0 0.0
  %614 = vmatprep.subr.mxu0 0.0
  %615 = vmatpush1.msra.mxu0 0.0
  %616 = vmatprep.subr.mxu0 0.0
  %617 = vmatpush1.msra.mxu0 0.0
  %618 = vmatprep.subr.mxu0 0.0
  %619 = vmatpush1.msra.mxu0 0.0
  %620 = vmatprep.subr.mxu0 0.0
  %621 = vmatpush1.msra.mxu0 0.0
  %622 = vmatprep.subr.mxu0 0.0
  %623 = vmatpush1.msra.mxu0 0.0
  %624 = vmatprep.mubr.f32.mxu0 0.0
  %625 = vmatmul.mubr.f32.gmra.mrb[0].mxu0 %v556
  %v626 = vpop.f32.mrb[0].mxu0
  %v627 = vadd.f32 0.0, %v626
  %v628 = vpop.f32.mrb[0].mxu0
  %629 = vmatprep.mubr.f32.mxu0 0.0
  %630 = vmatmul.mubr.f32.gmra.mrb[0].mxu0 %v558
  %v631 = vpop.f32.mrb[0].mxu0
  %v632 = vadd.f32 0.0, %v631
  %v633 = vpop.f32.mrb[0].mxu0
  %634 = vdwg.mxu0
  %635 = vrot.lane.b32.xlu0 %v295, 64
  %v636 = vpop.permute.xlu0 %635
  %637 = vrot.lane.b32.xlu0 %v300, 64
  %v638 = vpop.permute.xlu0 %637
  %v639 = vsel %vm51, %v636, 0
  %v641 = vsel %vm51, %v638, 0
  %643 = vmatprep.subr.mxu0 0.0
  %644 = vmatpush1.msra.mxu0 %v303
  %645 = vmatprep.subr.mxu0 0.0
  %646 = vmatpush1.msra.mxu0 %v304
  %647 = vmatprep.subr.mxu0 0.0
  %648 = vmatpush1.msra.mxu0 0.0
  %649 = vmatprep.subr.mxu0 0.0
  %650 = vmatpush1.msra.mxu0 0.0
  %651 = vmatprep.subr.mxu0 0.0
  %652 = vmatpush1.msra.mxu0 0.0
  %653 = vmatprep.subr.mxu0 0.0
  %654 = vmatpush1.msra.mxu0 0.0
  %655 = vmatprep.subr.mxu0 0.0
  %656 = vmatpush1.msra.mxu0 0.0
  %657 = vmatprep.subr.mxu0 0.0
  %658 = vmatpush1.msra.mxu0 0.0
  %659 = vmatprep.subr.mxu0 0.0
  %660 = vmatpush1.msra.mxu0 0.0
  %661 = vmatprep.subr.mxu0 0.0
  %662 = vmatpush1.msra.mxu0 0.0
  %663 = vmatprep.subr.mxu0 0.0
  %664 = vmatpush1.msra.mxu0 0.0
  %665 = vmatprep.subr.mxu0 0.0
  %666 = vmatpush1.msra.mxu0 0.0
  %667 = vmatprep.subr.mxu0 0.0
  %668 = vmatpush1.msra.mxu0 0.0
  %669 = vmatprep.subr.mxu0 0.0
  %670 = vmatpush1.msra.mxu0 0.0
  %671 = vmatprep.subr.mxu0 0.0
  %672 = vmatpush1.msra.mxu0 0.0
  %673 = vmatprep.subr.mxu0 0.0
  %674 = vmatpush1.msra.mxu0 0.0
  %675 = vmatprep.subr.mxu0 0.0
  %676 = vmatpush1.msra.mxu0 0.0
  %677 = vmatprep.subr.mxu0 0.0
  %678 = vmatpush1.msra.mxu0 0.0
  %679 = vmatprep.subr.mxu0 0.0
  %680 = vmatpush1.msra.mxu0 0.0
  %681 = vmatprep.subr.mxu0 0.0
  %682 = vmatpush1.msra.mxu0 0.0
  %683 = vmatprep.subr.mxu0 0.0
  %684 = vmatpush1.msra.mxu0 0.0
  %685 = vmatprep.subr.mxu0 0.0
  %686 = vmatpush1.msra.mxu0 0.0
  %687 = vmatprep.subr.mxu0 0.0
  %688 = vmatpush1.msra.mxu0 0.0
  %689 = vmatprep.subr.mxu0 0.0
  %690 = vmatpush1.msra.mxu0 0.0
  %691 = vmatprep.subr.mxu0 0.0
  %692 = vmatpush1.msra.mxu0 0.0
  %693 = vmatprep.subr.mxu0 0.0
  %694 = vmatpush1.msra.mxu0 0.0
  %695 = vmatprep.subr.mxu0 0.0
  %696 = vmatpush1.msra.mxu0 0.0
  %697 = vmatprep.subr.mxu0 0.0
  %698 = vmatpush1.msra.mxu0 0.0
  %699 = vmatprep.subr.mxu0 0.0
  %700 = vmatpush1.msra.mxu0 0.0
  %701 = vmatprep.subr.mxu0 0.0
  %702 = vmatpush1.msra.mxu0 0.0
  %703 = vmatprep.subr.mxu0 0.0
  %704 = vmatpush1.msra.mxu0 0.0
  %705 = vmatprep.subr.mxu0 0.0
  %706 = vmatpush1.msra.mxu0 0.0
  %707 = vmatprep.mubr.f32.mxu0 0.0
  %708 = vmatmul.mubr.f32.gmra.mrb[0].mxu0 %v639
  %v709 = vpop.f32.mrb[0].mxu0
  %v710 = vadd.f32 0.0, %v709
  %v711 = vpop.f32.mrb[0].mxu0
  %712 = vmatprep.mubr.f32.mxu0 0.0
  %713 = vmatmul.mubr.f32.gmra.mrb[0].mxu0 %v641
  %v714 = vpop.f32.mrb[0].mxu0
  %v715 = vadd.f32 0.0, %v714
  %v716 = vpop.f32.mrb[0].mxu0
  %717 = vdwg.mxu0
  %718 = vrot.lane.b32.xlu0 %v295, 48
  %v719 = vpop.permute.xlu0 %718
  %720 = vrot.lane.b32.xlu0 %v300, 48
  %v721 = vpop.permute.xlu0 %720
  %v722 = vsel %vm51, %v719, 0
  %v724 = vsel %vm51, %v721, 0
  %726 = vmatprep.subr.mxu0 0.0
  %727 = vmatpush1.msra.mxu0 %v303
  %728 = vmatprep.subr.mxu0 0.0
  %729 = vmatpush1.msra.mxu0 %v304
  %730 = vmatprep.subr.mxu0 0.0
  %731 = vmatpush1.msra.mxu0 0.0
  %732 = vmatprep.subr.mxu0 0.0
  %733 = vmatpush1.msra.mxu0 0.0
  %734 = vmatprep.subr.mxu0 0.0
  %735 = vmatpush1.msra.mxu0 0.0
  %736 = vmatprep.subr.mxu0 0.0
  %737 = vmatpush1.msra.mxu0 0.0
  %738 = vmatprep.subr.mxu0 0.0
  %739 = vmatpush1.msra.mxu0 0.0
  %740 = vmatprep.subr.mxu0 0.0
  %741 = vmatpush1.msra.mxu0 0.0
  %742 = vmatprep.subr.mxu0 0.0
  %743 = vmatpush1.msra.mxu0 0.0
  %744 = vmatprep.subr.mxu0 0.0
  %745 = vmatpush1.msra.mxu0 0.0
  %746 = vmatprep.subr.mxu0 0.0
  %747 = vmatpush1.msra.mxu0 0.0
  %748 = vmatprep.subr.mxu0 0.0
  %749 = vmatpush1.msra.mxu0 0.0
  %750 = vmatprep.subr.mxu0 0.0
  %751 = vmatpush1.msra.mxu0 0.0
  %752 = vmatprep.subr.mxu0 0.0
  %753 = vmatpush1.msra.mxu0 0.0
  %754 = vmatprep.subr.mxu0 0.0
  %755 = vmatpush1.msra.mxu0 0.0
  %756 = vmatprep.subr.mxu0 0.0
  %757 = vmatpush1.msra.mxu0 0.0
  %758 = vmatprep.subr.mxu0 0.0
  %759 = vmatpush1.msra.mxu0 0.0
  %760 = vmatprep.subr.mxu0 0.0
  %761 = vmatpush1.msra.mxu0 0.0
  %762 = vmatprep.subr.mxu0 0.0
  %763 = vmatpush1.msra.mxu0 0.0
  %764 = vmatprep.subr.mxu0 0.0
  %765 = vmatpush1.msra.mxu0 0.0
  %766 = vmatprep.subr.mxu0 0.0
  %767 = vmatpush1.msra.mxu0 0.0
  %768 = vmatprep.subr.mxu0 0.0
  %769 = vmatpush1.msra.mxu0 0.0
  %770 = vmatprep.subr.mxu0 0.0
  %771 = vmatpush1.msra.mxu0 0.0
  %772 = vmatprep.subr.mxu0 0.0
  %773 = vmatpush1.msra.mxu0 0.0
  %774 = vmatprep.subr.mxu0 0.0
  %775 = vmatpush1.msra.mxu0 0.0
  %776 = vmatprep.subr.mxu0 0.0
  %777 = vmatpush1.msra.mxu0 0.0
  %778 = vmatprep.subr.mxu0 0.0
  %779 = vmatpush1.msra.mxu0 0.0
  %780 = vmatprep.subr.mxu0 0.0
  %781 = vmatpush1.msra.mxu0 0.0
  %782 = vmatprep.subr.mxu0 0.0
  %783 = vmatpush1.msra.mxu0 0.0
  %784 = vmatprep.subr.mxu0 0.0
  %785 = vmatpush1.msra.mxu0 0.0
  %786 = vmatprep.subr.mxu0 0.0
  %787 = vmatpush1.msra.mxu0 0.0
  %788 = vmatprep.subr.mxu0 0.0
  %789 = vmatpush1.msra.mxu0 0.0
  %790 = vmatprep.mubr.f32.mxu0 0.0
  %791 = vmatmul.mubr.f32.gmra.mrb[0].mxu0 %v722
  %v792 = vpop.f32.mrb[0].mxu0
  %v793 = vadd.f32 0.0, %v792
  %v794 = vpop.f32.mrb[0].mxu0
  %795 = vmatprep.mubr.f32.mxu0 0.0
  %796 = vmatmul.mubr.f32.gmra.mrb[0].mxu0 %v724
  %v797 = vpop.f32.mrb[0].mxu0
  %v798 = vadd.f32 0.0, %v797
  %v799 = vpop.f32.mrb[0].mxu0
  %800 = vdwg.mxu0
  %801 = vrot.lane.b32.xlu0 %v295, 32
  %v802 = vpop.permute.xlu0 %801
  %803 = vrot.lane.b32.xlu0 %v300, 32
  %v804 = vpop.permute.xlu0 %803
  %v805 = vsel %vm51, %v802, 0
  %v807 = vsel %vm51, %v804, 0
  %809 = vmatprep.subr.mxu0 0.0
  %810 = vmatpush1.msra.mxu0 %v303
  %811 = vmatprep.subr.mxu0 0.0
  %812 = vmatpush1.msra.mxu0 %v304
  %813 = vmatprep.subr.mxu0 0.0
  %814 = vmatpush1.msra.mxu0 0.0
  %815 = vmatprep.subr.mxu0 0.0
  %816 = vmatpush1.msra.mxu0 0.0
  %817 = vmatprep.subr.mxu0 0.0
  %818 = vmatpush1.msra.mxu0 0.0
  %819 = vmatprep.subr.mxu0 0.0
  %820 = vmatpush1.msra.mxu0 0.0
  %821 = vmatprep.subr.mxu0 0.0
  %822 = vmatpush1.msra.mxu0 0.0
  %823 = vmatprep.subr.mxu0 0.0
  %824 = vmatpush1.msra.mxu0 0.0
  %825 = vmatprep.subr.mxu0 0.0
  %826 = vmatpush1.msra.mxu0 0.0
  %827 = vmatprep.subr.mxu0 0.0
  %828 = vmatpush1.msra.mxu0 0.0
  %829 = vmatprep.subr.mxu0 0.0
  %830 = vmatpush1.msra.mxu0 0.0
  %831 = vmatprep.subr.mxu0 0.0
  %832 = vmatpush1.msra.mxu0 0.0
  %833 = vmatprep.subr.mxu0 0.0
  %834 = vmatpush1.msra.mxu0 0.0
  %835 = vmatprep.subr.mxu0 0.0
  %836 = vmatpush1.msra.mxu0 0.0
  %837 = vmatprep.subr.mxu0 0.0
  %838 = vmatpush1.msra.mxu0 0.0
  %839 = vmatprep.subr.mxu0 0.0
  %840 = vmatpush1.msra.mxu0 0.0
  %841 = vmatprep.subr.mxu0 0.0
  %842 = vmatpush1.msra.mxu0 0.0
  %843 = vmatprep.subr.mxu0 0.0
  %844 = vmatpush1.msra.mxu0 0.0
  %845 = vmatprep.subr.mxu0 0.0
  %846 = vmatpush1.msra.mxu0 0.0
  %847 = vmatprep.subr.mxu0 0.0
  %848 = vmatpush1.msra.mxu0 0.0
  %849 = vmatprep.subr.mxu0 0.0
  %850 = vmatpush1.msra.mxu0 0.0
  %851 = vmatprep.subr.mxu0 0.0
  %852 = vmatpush1.msra.mxu0 0.0
  %853 = vmatprep.subr.mxu0 0.0
  %854 = vmatpush1.msra.mxu0 0.0
  %855 = vmatprep.subr.mxu0 0.0
  %856 = vmatpush1.msra.mxu0 0.0
  %857 = vmatprep.subr.mxu0 0.0
  %858 = vmatpush1.msra.mxu0 0.0
  %859 = vmatprep.subr.mxu0 0.0
  %860 = vmatpush1.msra.mxu0 0.0
  %861 = vmatprep.subr.mxu0 0.0
  %862 = vmatpush1.msra.mxu0 0.0
  %863 = vmatprep.subr.mxu0 0.0
  %864 = vmatpush1.msra.mxu0 0.0
  %865 = vmatprep.subr.mxu0 0.0
  %866 = vmatpush1.msra.mxu0 0.0
  %867 = vmatprep.subr.mxu0 0.0
  %868 = vmatpush1.msra.mxu0 0.0
  %869 = vmatprep.subr.mxu0 0.0
  %870 = vmatpush1.msra.mxu0 0.0
  %871 = vmatprep.subr.mxu0 0.0
  %872 = vmatpush1.msra.mxu0 0.0
  %873 = vmatprep.mubr.f32.mxu0 0.0
  %874 = vmatmul.mubr.f32.gmra.mrb[0].mxu0 %v805
  %v875 = vpop.f32.mrb[0].mxu0
  %v876 = vadd.f32 0.0, %v875
  %v877 = vpop.f32.mrb[0].mxu0
  %878 = vmatprep.mubr.f32.mxu0 0.0
  %879 = vmatmul.mubr.f32.gmra.mrb[0].mxu0 %v807
  %v880 = vpop.f32.mrb[0].mxu0
  %v881 = vadd.f32 0.0, %v880
  %v882 = vpop.f32.mrb[0].mxu0
  %883 = vdwg.mxu0
  %884 = vrot.lane.b32.xlu0 %v295, 16
  %v885 = vpop.permute.xlu0 %884
  %886 = vrot.lane.b32.xlu0 %v300, 16
  %v887 = vpop.permute.xlu0 %886
  %v888 = vsel %vm51, %v885, 0
  %v890 = vsel %vm51, %v887, 0
  %892 = vmatprep.subr.mxu0 0.0
  %893 = vmatpush1.msra.mxu0 %v303
  %894 = vmatprep.subr.mxu0 0.0
  %895 = vmatpush1.msra.mxu0 %v304
  %896 = vmatprep.subr.mxu0 0.0
  %897 = vmatpush1.msra.mxu0 0.0
  %898 = vmatprep.subr.mxu0 0.0
  %899 = vmatpush1.msra.mxu0 0.0
  %900 = vmatprep.subr.mxu0 0.0
  %901 = vmatpush1.msra.mxu0 0.0
  %902 = vmatprep.subr.mxu0 0.0
  %903 = vmatpush1.msra.mxu0 0.0
  %904 = vmatprep.subr.mxu0 0.0
  %905 = vmatpush1.msra.mxu0 0.0
  %906 = vmatprep.subr.mxu0 0.0
  %907 = vmatpush1.msra.mxu0 0.0
  %908 = vmatprep.subr.mxu0 0.0
  %909 = vmatpush1.msra.mxu0 0.0
  %910 = vmatprep.subr.mxu0 0.0
  %911 = vmatpush1.msra.mxu0 0.0
  %912 = vmatprep.subr.mxu0 0.0
  %913 = vmatpush1.msra.mxu0 0.0
  %914 = vmatprep.subr.mxu0 0.0
  %915 = vmatpush1.msra.mxu0 0.0
  %916 = vmatprep.subr.mxu0 0.0
  %917 = vmatpush1.msra.mxu0 0.0
  %918 = vmatprep.subr.mxu0 0.0
  %919 = vmatpush1.msra.mxu0 0.0
  %920 = vmatprep.subr.mxu0 0.0
  %921 = vmatpush1.msra.mxu0 0.0
  %922 = vmatprep.subr.mxu0 0.0
  %923 = vmatpush1.msra.mxu0 0.0
  %924 = vmatprep.subr.mxu0 0.0
  %925 = vmatpush1.msra.mxu0 0.0
  %926 = vmatprep.subr.mxu0 0.0
  %927 = vmatpush1.msra.mxu0 0.0
  %928 = vmatprep.subr.mxu0 0.0
  %929 = vmatpush1.msra.mxu0 0.0
  %930 = vmatprep.subr.mxu0 0.0
  %931 = vmatpush1.msra.mxu0 0.0
  %932 = vmatprep.subr.mxu0 0.0
  %933 = vmatpush1.msra.mxu0 0.0
  %934 = vmatprep.subr.mxu0 0.0
  %935 = vmatpush1.msra.mxu0 0.0
  %936 = vmatprep.subr.mxu0 0.0
  %937 = vmatpush1.msra.mxu0 0.0
  %938 = vmatprep.subr.mxu0 0.0
  %939 = vmatpush1.msra.mxu0 0.0
  %940 = vmatprep.subr.mxu0 0.0
  %941 = vmatpush1.msra.mxu0 0.0
  %942 = vmatprep.subr.mxu0 0.0
  %943 = vmatpush1.msra.mxu0 0.0
  %944 = vmatprep.subr.mxu0 0.0
  %945 = vmatpush1.msra.mxu0 0.0
  %946 = vmatprep.subr.mxu0 0.0
  %947 = vmatpush1.msra.mxu0 0.0
  %948 = vmatprep.subr.mxu0 0.0
  %949 = vmatpush1.msra.mxu0 0.0
  %950 = vmatprep.subr.mxu0 0.0
  %951 = vmatpush1.msra.mxu0 0.0
  %952 = vmatprep.subr.mxu0 0.0
  %953 = vmatpush1.msra.mxu0 0.0
  %954 = vmatprep.subr.mxu0 0.0
  %955 = vmatpush1.msra.mxu0 0.0
  %956 = vmatprep.mubr.f32.mxu0 0.0
  %957 = vmatmul.mubr.f32.gmra.mrb[0].mxu0 %v888
  %v958 = vpop.f32.mrb[0].mxu0
  %v959 = vadd.f32 0.0, %v958
  %v960 = vpop.f32.mrb[0].mxu0
  %961 = vmatprep.mubr.f32.mxu0 0.0
  %962 = vmatmul.mubr.f32.gmra.mrb[0].mxu0 %v890
  %v963 = vpop.f32.mrb[0].mxu0
  %v964 = vadd.f32 0.0, %v963
  %v965 = vpop.f32.mrb[0].mxu0
  %966 = vdwg.mxu0
  %969 = vrot.lane.b32.xlu0 %v461, 16
  %v970 = vpop.permute.xlu0 %969
  %971 = vrot.lane.b32.xlu0 %v466, 16
  %v972 = vpop.permute.xlu0 %971
  %977 = vrot.lane.b32.xlu0 %v544, 32
  %v978 = vpop.permute.xlu0 %977
  %979 = vrot.lane.b32.xlu0 %v549, 32
  %v980 = vpop.permute.xlu0 %979
  %985 = vrot.lane.b32.xlu0 %v627, 48
  %v986 = vpop.permute.xlu0 %985
  %987 = vrot.lane.b32.xlu0 %v632, 48
  %v988 = vpop.permute.xlu0 %987
  %993 = vrot.lane.b32.xlu0 %v710, 64
  %v994 = vpop.permute.xlu0 %993
  %995 = vrot.lane.b32.xlu0 %v715, 64
  %v996 = vpop.permute.xlu0 %995
  %1001 = vrot.lane.b32.xlu0 %v793, 80
  %v1002 = vpop.permute.xlu0 %1001
  %1003 = vrot.lane.b32.xlu0 %v798, 80
  %v1004 = vpop.permute.xlu0 %1003
  %1009 = vrot.lane.b32.xlu0 %v876, 96
  %v1010 = vpop.permute.xlu0 %1009
  %1011 = vrot.lane.b32.xlu0 %v881, 96
  %v1012 = vpop.permute.xlu0 %1011
  %1017 = vrot.lane.b32.xlu0 %v959, 112
  %v1018 = vpop.permute.xlu0 %1017
  %1019 = vrot.lane.b32.xlu0 %v964, 112
  %v1020 = vpop.permute.xlu0 %1019
  %v1023 = vsel %vm51, %v378, %v970
  %v1024 = vsel %vm51, %v383, %v972
  %vm1025 = vcmask 261120
  %v1026 = vsel %vm1025, %v1023, %v978
  %v1027 = vsel %vm1025, %v1024, %v980
  %vm1028 = vcmask 392192
  %v1029 = vsel %vm1028, %v1026, %v986
  %v1030 = vsel %vm1028, %v1027, %v988
  %vm1031 = vcmask 523264
  %v1032 = vsel %vm1031, %v1029, %v994
  %v1033 = vsel %vm1031, %v1030, %v996
  %vm1034 = vcmask 654336
  %v1035 = vsel %vm1034, %v1032, %v1002
  %v1036 = vsel %vm1034, %v1033, %v1004
  %vm1037 = vcmask 785408
  %v1038 = vsel %vm1037, %v1035, %v1010
  %v1039 = vsel %vm1037, %v1036, %v1012
  %vm1040 = vcmask 916480
  %v1041 = vsel %vm1040, %v1038, %v1018
  %v1042 = vsel %vm1040, %v1039, %v1020
  %v1043 = vld [vmem:[%s2 + $0x30] sm:$0xff]
  %v1044 = vld [vmem:[%s2 + $0x38] sm:$0xff]
  %v1046 = vsel %vm51, %v1043, 0
  %v1049 = vsel %vm51, %v1044, 0
  %1051 = vmatprep.subr.mxu0 0.0
  %1052 = vmatpush1.msra.mxu0 %v1041
  %1053 = vmatprep.subr.mxu0 0.0
  %1054 = vmatpush1.msra.mxu0 %v1042
  %1055 = vmatprep.subr.mxu0 0.0
  %1056 = vmatpush1.msra.mxu0 0.0
  %1057 = vmatprep.subr.mxu0 0.0
  %1058 = vmatpush1.msra.mxu0 0.0
  %1059 = vmatprep.subr.mxu0 0.0
  %1060 = vmatpush1.msra.mxu0 0.0
  %1061 = vmatprep.subr.mxu0 0.0
  %1062 = vmatpush1.msra.mxu0 0.0
  %1063 = vmatprep.subr.mxu0 0.0
  %1064 = vmatpush1.msra.mxu0 0.0
  %1065 = vmatprep.subr.mxu0 0.0
  %1066 = vmatpush1.msra.mxu0 0.0
  %1067 = vmatprep.subr.mxu0 0.0
  %1068 = vmatpush1.msra.mxu0 0.0
  %1069 = vmatprep.subr.mxu0 0.0
  %1070 = vmatpush1.msra.mxu0 0.0
  %1071 = vmatprep.subr.mxu0 0.0
  %1072 = vmatpush1.msra.mxu0 0.0
  %1073 = vmatprep.subr.mxu0 0.0
  %1074 = vmatpush1.msra.mxu0 0.0
  %1075 = vmatprep.subr.mxu0 0.0
  %1076 = vmatpush1.msra.mxu0 0.0
  %1077 = vmatprep.subr.mxu0 0.0
  %1078 = vmatpush1.msra.mxu0 0.0
  %1079 = vmatprep.subr.mxu0 0.0
  %1080 = vmatpush1.msra.mxu0 0.0
  %1081 = vmatprep.subr.mxu0 0.0
  %1082 = vmatpush1.msra.mxu0 0.0
  %1083 = vmatprep.subr.mxu0 0.0
  %1084 = vmatpush1.msra.mxu0 0.0
  %1085 = vmatprep.subr.mxu0 0.0
  %1086 = vmatpush1.msra.mxu0 0.0
  %1087 = vmatprep.subr.mxu0 0.0
  %1088 = vmatpush1.msra.mxu0 0.0
  %1089 = vmatprep.subr.mxu0 0.0
  %1090 = vmatpush1.msra.mxu0 0.0
  %1091 = vmatprep.subr.mxu0 0.0
  %1092 = vmatpush1.msra.mxu0 0.0
  %1093 = vmatprep.subr.mxu0 0.0
  %1094 = vmatpush1.msra.mxu0 0.0
  %1095 = vmatprep.subr.mxu0 0.0
  %1096 = vmatpush1.msra.mxu0 0.0
  %1097 = vmatprep.subr.mxu0 0.0
  %1098 = vmatpush1.msra.mxu0 0.0
  %1099 = vmatprep.subr.mxu0 0.0
  %1100 = vmatpush1.msra.mxu0 0.0
  %1101 = vmatprep.subr.mxu0 0.0
  %1102 = vmatpush1.msra.mxu0 0.0
  %1103 = vmatprep.subr.mxu0 0.0
  %1104 = vmatpush1.msra.mxu0 0.0
  %1105 = vmatprep.subr.mxu0 0.0
  %1106 = vmatpush1.msra.mxu0 0.0
  %1107 = vmatprep.subr.mxu0 0.0
  %1108 = vmatpush1.msra.mxu0 0.0
  %1109 = vmatprep.subr.mxu0 0.0
  %1110 = vmatpush1.msra.mxu0 0.0
  %1111 = vmatprep.subr.mxu0 0.0
  %1112 = vmatpush1.msra.mxu0 0.0
  %1113 = vmatprep.subr.mxu0 0.0
  %1114 = vmatpush1.msra.mxu0 0.0
  %1115 = vmatprep.mubr.f32.mxu0 0.0
  %1116 = vmatmul.mubr.f32.gmra.mrb[0].mxu0 %v1046
  %v1117 = vpop.f32.mrb[0].mxu0
  %v1118 = vadd.f32 %v28, %v1117
  %v1119 = vpop.f32.mrb[0].mxu0
  %1120 = vmatprep.mubr.f32.mxu0 0.0
  %1121 = vmatmul.mubr.f32.gmra.mrb[0].mxu0 %v1049
  %v1122 = vpop.f32.mrb[0].mxu0
  %v1123 = vadd.f32 %v29, %v1122
  %v1124 = vpop.f32.mrb[0].mxu0
  %1125 = vdwg.mxu0
  %v1126 = vmax.f32 %v1118, 0.0
  %v1127 = vmax.f32 %v1123, 0.0
  %v1128 = vld [vmem:[%s2 + $0x40] sm:$0xff]
  %v1129 = vld [vmem:[%s2 + $0x48] sm:$0xff]
  %v1131 = vsel %vm51, %v1128, 0
  %v1134 = vsel %vm51, %v1129, 0
  %1136 = vmatprep.subr.mxu0 0.0
  %1137 = vmatpush1.msra.mxu0 %v1126
  %1138 = vmatprep.subr.mxu0 0.0
  %1139 = vmatpush1.msra.mxu0 %v1127
  %1140 = vmatprep.subr.mxu0 0.0
  %1141 = vmatpush1.msra.mxu0 0.0
  %1142 = vmatprep.subr.mxu0 0.0
  %1143 = vmatpush1.msra.mxu0 0.0
  %1144 = vmatprep.subr.mxu0 0.0
  %1145 = vmatpush1.msra.mxu0 0.0
  %1146 = vmatprep.subr.mxu0 0.0
  %1147 = vmatpush1.msra.mxu0 0.0
  %1148 = vmatprep.subr.mxu0 0.0
  %1149 = vmatpush1.msra.mxu0 0.0
  %1150 = vmatprep.subr.mxu0 0.0
  %1151 = vmatpush1.msra.mxu0 0.0
  %1152 = vmatprep.subr.mxu0 0.0
  %1153 = vmatpush1.msra.mxu0 0.0
  %1154 = vmatprep.subr.mxu0 0.0
  %1155 = vmatpush1.msra.mxu0 0.0
  %1156 = vmatprep.subr.mxu0 0.0
  %1157 = vmatpush1.msra.mxu0 0.0
  %1158 = vmatprep.subr.mxu0 0.0
  %1159 = vmatpush1.msra.mxu0 0.0
  %1160 = vmatprep.subr.mxu0 0.0
  %1161 = vmatpush1.msra.mxu0 0.0
  %1162 = vmatprep.subr.mxu0 0.0
  %1163 = vmatpush1.msra.mxu0 0.0
  %1164 = vmatprep.subr.mxu0 0.0
  %1165 = vmatpush1.msra.mxu0 0.0
  %1166 = vmatprep.subr.mxu0 0.0
  %1167 = vmatpush1.msra.mxu0 0.0
  %1168 = vmatprep.subr.mxu0 0.0
  %1169 = vmatpush1.msra.mxu0 0.0
  %1170 = vmatprep.subr.mxu0 0.0
  %1171 = vmatpush1.msra.mxu0 0.0
  %1172 = vmatprep.subr.mxu0 0.0
  %1173 = vmatpush1.msra.mxu0 0.0
  %1174 = vmatprep.subr.mxu0 0.0
  %1175 = vmatpush1.msra.mxu0 0.0
  %1176 = vmatprep.subr.mxu0 0.0
  %1177 = vmatpush1.msra.mxu0 0.0
  %1178 = vmatprep.subr.mxu0 0.0
  %1179 = vmatpush1.msra.mxu0 0.0
  %1180 = vmatprep.subr.mxu0 0.0
  %1181 = vmatpush1.msra.mxu0 0.0
  %1182 = vmatprep.subr.mxu0 0.0
  %1183 = vmatpush1.msra.mxu0 0.0
  %1184 = vmatprep.subr.mxu0 0.0
  %1185 = vmatpush1.msra.mxu0 0.0
  %1186 = vmatprep.subr.mxu0 0.0
  %1187 = vmatpush1.msra.mxu0 0.0
  %1188 = vmatprep.subr.mxu0 0.0
  %1189 = vmatpush1.msra.mxu0 0.0
  %1190 = vmatprep.subr.mxu0 0.0
  %1191 = vmatpush1.msra.mxu0 0.0
  %1192 = vmatprep.subr.mxu0 0.0
  %1193 = vmatpush1.msra.mxu0 0.0
  %1194 = vmatprep.subr.mxu0 0.0
  %1195 = vmatpush1.msra.mxu0 0.0
  %1196 = vmatprep.subr.mxu0 0.0
  %1197 = vmatpush1.msra.mxu0 0.0
  %1198 = vmatprep.subr.mxu0 0.0
  %1199 = vmatpush1.msra.mxu0 0.0
  %1200 = vmatprep.mubr.f32.mxu0 0.0
  %1201 = vmatmul.mubr.f32.gmra.mrb[0].mxu0 %v1131
  %v1202 = vpop.f32.mrb[0].mxu0
  %v1203 = vadd.f32 %v30, %v1202
  %v1204 = vpop.f32.mrb[0].mxu0
  %1205 = vmatprep.mubr.f32.mxu0 0.0
  %1206 = vmatmul.mubr.f32.gmra.mrb[0].mxu0 %v1134
  %v1207 = vpop.f32.mrb[0].mxu0
  %v1208 = vadd.f32 %v31, %v1207
  %v1209 = vpop.f32.mrb[0].mxu0
  %1210 = vdwg.mxu0
  %v1211 = vmax.f32 %v1203, 0.0
  %v1212 = vmax.f32 %v1208, 0.0
  %v1213 = vld [vmem:[%s2 + $0x50] sm:$0xff]
  %v1214 = vld [vmem:[%s2 + $0x58] sm:$0xff]
  %v1216 = vsel %vm51, %v1213, 0
  %v1219 = vsel %vm51, %v1214, 0
  %1221 = vmatprep.subr.mxu0 0.0
  %1222 = vmatpush1.msra.mxu0 %v1211
  %1223 = vmatprep.subr.mxu0 0.0
  %1224 = vmatpush1.msra.mxu0 %v1212
  %1225 = vmatprep.subr.mxu0 0.0
  %1226 = vmatpush1.msra.mxu0 0.0
  %1227 = vmatprep.subr.mxu0 0.0
  %1228 = vmatpush1.msra.mxu0 0.0
  %1229 = vmatprep.subr.mxu0 0.0
  %1230 = vmatpush1.msra.mxu0 0.0
  %1231 = vmatprep.subr.mxu0 0.0
  %1232 = vmatpush1.msra.mxu0 0.0
  %1233 = vmatprep.subr.mxu0 0.0
  %1234 = vmatpush1.msra.mxu0 0.0
  %1235 = vmatprep.subr.mxu0 0.0
  %1236 = vmatpush1.msra.mxu0 0.0
  %1237 = vmatprep.subr.mxu0 0.0
  %1238 = vmatpush1.msra.mxu0 0.0
  %1239 = vmatprep.subr.mxu0 0.0
  %1240 = vmatpush1.msra.mxu0 0.0
  %1241 = vmatprep.subr.mxu0 0.0
  %1242 = vmatpush1.msra.mxu0 0.0
  %1243 = vmatprep.subr.mxu0 0.0
  %1244 = vmatpush1.msra.mxu0 0.0
  %1245 = vmatprep.subr.mxu0 0.0
  %1246 = vmatpush1.msra.mxu0 0.0
  %1247 = vmatprep.subr.mxu0 0.0
  %1248 = vmatpush1.msra.mxu0 0.0
  %1249 = vmatprep.subr.mxu0 0.0
  %1250 = vmatpush1.msra.mxu0 0.0
  %1251 = vmatprep.subr.mxu0 0.0
  %1252 = vmatpush1.msra.mxu0 0.0
  %1253 = vmatprep.subr.mxu0 0.0
  %1254 = vmatpush1.msra.mxu0 0.0
  %1255 = vmatprep.subr.mxu0 0.0
  %1256 = vmatpush1.msra.mxu0 0.0
  %1257 = vmatprep.subr.mxu0 0.0
  %1258 = vmatpush1.msra.mxu0 0.0
  %1259 = vmatprep.subr.mxu0 0.0
  %1260 = vmatpush1.msra.mxu0 0.0
  %1261 = vmatprep.subr.mxu0 0.0
  %1262 = vmatpush1.msra.mxu0 0.0
  %1263 = vmatprep.subr.mxu0 0.0
  %1264 = vmatpush1.msra.mxu0 0.0
  %1265 = vmatprep.subr.mxu0 0.0
  %1266 = vmatpush1.msra.mxu0 0.0
  %1267 = vmatprep.subr.mxu0 0.0
  %1268 = vmatpush1.msra.mxu0 0.0
  %1269 = vmatprep.subr.mxu0 0.0
  %1270 = vmatpush1.msra.mxu0 0.0
  %1271 = vmatprep.subr.mxu0 0.0
  %1272 = vmatpush1.msra.mxu0 0.0
  %1273 = vmatprep.subr.mxu0 0.0
  %1274 = vmatpush1.msra.mxu0 0.0
  %1275 = vmatprep.subr.mxu0 0.0
  %1276 = vmatpush1.msra.mxu0 0.0
  %1277 = vmatprep.subr.mxu0 0.0
  %1278 = vmatpush1.msra.mxu0 0.0
  %1279 = vmatprep.subr.mxu0 0.0
  %1280 = vmatpush1.msra.mxu0 0.0
  %1281 = vmatprep.subr.mxu0 0.0
  %1282 = vmatpush1.msra.mxu0 0.0
  %1283 = vmatprep.subr.mxu0 0.0
  %1284 = vmatpush1.msra.mxu0 0.0
  %1285 = vmatprep.mubr.f32.mxu0 0.0
  %1286 = vmatmul.mubr.f32.gmra.mrb[0].mxu0 %v1216
  %v1287 = vpop.f32.mrb[0].mxu0
  %v1288 = vadd.f32 %v32, %v1287
  %v1289 = vpop.f32.mrb[0].mxu0
  %1290 = vmatprep.mubr.f32.mxu0 0.0
  %1291 = vmatmul.mubr.f32.gmra.mrb[0].mxu0 %v1219
  %v1292 = vpop.f32.mrb[0].mxu0
  %v1293 = vadd.f32 %v33, %v1292
  %v1294 = vpop.f32.mrb[0].mxu0
  %1295 = vdwg.mxu0
  %v1296 = vmax.f32 %v1288, 0.0
  %v1297 = vmax.f32 %v1293, 0.0
  %v1298 = vmul.f32 %v34, %v1296
  %v1299 = vmul.f32 %v35, %v1297
  %v1300 = vadd.f32 %v1298, %v1299
  %v1301 = vrot.slane %v1300, 4
  %v1302 = vadd.f32 %v1300, %v1301
  %v1303 = vrot.slane %v1302, 2
  %v1304 = vadd.f32 %v1302, %v1303
  %v1305 = vrot.slane %v1304, 1
  %v1306 = vadd.f32 %v1304, %v1305
  %v1307 = vadd.f32 %v1306, %v36
  %v1308 = vsub.f32 %v17, %v1307
  %v1309 = vmul.f32 %v1308, %v1308
  %1310 = vst [vmem:[%s4] sm:$0x1] %v1309
  // Predicated region
  $region18: #{_autoencoder_forward.1} parent=0 // pred_check
    _
  $region19: #{_autoencoder_forward.1} parent=0 // pred_check_branch
    %1312 = sbr.rel (0) target = $region21
  $region20: #{_autoencoder_forward.1} parent=0 // pred_region
    _
  $region21: #{_autoencoder_forward.1} parent=0 // pred_fallthru
    _
  // Predicated region
  $region22: #{_autoencoder_forward.1} parent=0 // pred_check
    _
  $region23: #{_autoencoder_forward.1} parent=0 // pred_check_branch
    %1314 = sbr.rel (0) target = $region25
  $region24: #{_autoencoder_forward.1} parent=0 // pred_region
    _
  $region25: #{_autoencoder_forward.1} parent=0 // pred_fallthru
    _

</llo_original>
